<compile_context>
chip_gen: v5e
topology: v5e:2x2
jax: 0.10.0
libtpu: 0.0.40
codegen_flags: <defaults>
</compile_context>

<pallas_src>
import jax
import jax.numpy as jnp
from jax.experimental import pallas as pl
from jax.experimental.pallas import tpu as pltpu  # noqa: F401  (TPU backend)

BN_EPS = 1e-5


def conv_bn_relu_kernel(w_ref, x_ref, gamma_ref, beta_ref, o_ref):
    # 1x1 conv == channel matmul on the MXU: (Cout, Cin) @ (Cin, M) -> (Cout, M),
    # f32 inputs, f32 accumulation.
    y = jnp.dot(w_ref[...], x_ref[...], preferred_element_type=jnp.float32)

    # BatchNorm2d training-mode statistics over the M = N*H*W axis (per output
    # channel). Two-pass, biased variance (matches PyTorch's normalization):
    # mean = E[y], var = E[(y - mean)^2]. y is already resident, so the second
    # traversal costs essentially nothing and avoids cancellation.
    m = jnp.float32(y.shape[1])
    mean = jnp.sum(y, axis=1, keepdims=True) / m           # (Cout, 1)
    c = y - mean
    var = jnp.sum(c * c, axis=1, keepdims=True) / m        # (Cout, 1)
    inv_std = jax.lax.rsqrt(var + BN_EPS)

    # gamma/beta arrive as lane-dense (1, Cout) rows; flip to (Cout, 1) columns
    # with one tiny XLU transpose each (off the critical DMA/launch path).
    gamma_col = jnp.transpose(gamma_ref[...])               # (Cout, 1)
    beta_col = jnp.transpose(beta_ref[...])                 # (Cout, 1)

    # normalize + affine + ReLU
    scale = gamma_col * inv_std
    o_ref[...] = jnp.maximum(c * scale + beta_col, 0.0)


@jax.jit
def conv_bn_relu(x_nchw, w_oihw, gamma, beta):
    N, Cin, H, W = x_nchw.shape
    Cout = w_oihw.shape[0]
    M = N * H * W

    # NCHW -> (Cin, M): for N == 1 this is a pure reshape (no HBM transpose).
    if N == 1:
        x2 = x_nchw.reshape(Cin, M)
    else:
        x2 = jnp.transpose(x_nchw, (1, 0, 2, 3)).reshape(Cin, M)
    # (Cout, Cin, 1, 1) -> (Cout, Cin): pure reshape, no transpose.
    w2 = w_oihw.reshape(Cout, Cin)

    # Lane-dense (1, Cout) rows: free metadata reshapes, contiguous DMA, no padding
    # beyond sublanes 1 -> 8.
    gamma_row = gamma.reshape(1, Cout).astype(jnp.float32)
    beta_row = beta.reshape(1, Cout).astype(jnp.float32)

    out2 = pl.pallas_call(
        conv_bn_relu_kernel,
        out_shape=jax.ShapeDtypeStruct((Cout, M), jnp.float32),
        in_specs=[
            pl.BlockSpec((Cout, Cin), lambda: (0, 0)),
            pl.BlockSpec((Cin, M), lambda: (0, 0)),
            pl.BlockSpec((1, Cout), lambda: (0, 0)),
            pl.BlockSpec((1, Cout), lambda: (0, 0)),
        ],
        out_specs=pl.BlockSpec((Cout, M), lambda: (0, 0)),
        cost_estimate=pl.CostEstimate(
            flops=2 * Cout * Cin * M,
            transcendentals=Cout,
            bytes_accessed=4 * (Cin * M + Cout * Cin + 2 * Cout + Cout * M),
        ),
    )(w2, x2, gamma_row, beta_row)

    # (Cout, M) -> NCHW: pure reshape for N == 1.
    if N == 1:
        return out2.reshape(1, Cout, H, W)
    return jnp.transpose(out2.reshape(Cout, N, H, W), (1, 0, 2, 3))


# TODO(synk): PyTorch BatchNorm2d in training mode also mutates running_mean /
# running_var; this kernel reproduces only the forward activation.

if __name__ == "__main__":
    key = jax.random.PRNGKey(0)
    k_x, k_w, k_g, k_b = jax.random.split(key, 4)

    N, Cin, H, W = 1, 1248, 14, 14
    Cout = 128

    x = jax.random.normal(k_x, (N, Cin, H, W), dtype=jnp.float32)
    # Conv2d(1248, 128, kernel_size=1, bias=False) weight: (Cout, Cin, 1, 1)
    conv_w = jax.random.normal(k_w, (Cout, Cin, 1, 1), dtype=jnp.float32) * 0.02
    # BatchNorm2d(128) affine params (synthetic deterministic init)
    gamma = 1.0 + 0.1 * jax.random.normal(k_g, (Cout,), dtype=jnp.float32)
    beta = 0.1 * jax.random.normal(k_b, (Cout,), dtype=jnp.float32)

    out = conv_bn_relu(x, conv_w, gamma, beta)
    jax.block_until_ready(out)

    # sanity check against a plain-JAX f32 reference (matmul inputs are f32 in the
    # kernel now, so the tolerance can be tighter than the previous bf16 variant).
    x2f = x.reshape(Cin, H * W)
    w2f = conv_w.reshape(Cout, Cin)
    y = w2f @ x2f
    mu = y.mean(axis=1, keepdims=True)
    var = ((y - mu) ** 2).mean(axis=1, keepdims=True)
    ref = jnp.maximum(
        (y - mu) * jax.lax.rsqrt(var + 1e-5) * gamma[:, None] + beta[:, None], 0.0
    ).reshape(1, Cout, H, W)

    assert out.shape == (N, Cout, H, W)
    assert jnp.allclose(out, ref, atol=1e-2, rtol=1e-2)

    print("KERNEL_OK")
</pallas_src>

<mosaic_0001>
module attributes {stable_mosaic.version = 11 : i64} {
  func.func @conv_bn_relu_kernel(%arg0: memref<128x1248xf32, #tpu.memory_space<vmem>>, %arg1: memref<1248x196xf32, #tpu.memory_space<vmem>>, %arg2: memref<1x128xf32, #tpu.memory_space<vmem>>, %arg3: memref<1x128xf32, #tpu.memory_space<vmem>>, %arg4: memref<128x196xf32, #tpu.memory_space<vmem>>) attributes {dimension_semantics = [], scalar_prefetch = 0 : i64, scratch_operands = 0 : i64, tpu.core_type = #tpu.core_type<tc>} {
    %c0 = arith.constant 0 : index
    %c0_0 = arith.constant 0 : index
    %0 = vector.load %arg0[%c0, %c0_0] : memref<128x1248xf32, #tpu.memory_space<vmem>>, vector<128x1248xf32>
    %c0_1 = arith.constant 0 : index
    %c0_2 = arith.constant 0 : index
    %1 = vector.load %arg1[%c0_1, %c0_2] : memref<1248x196xf32, #tpu.memory_space<vmem>>, vector<1248x196xf32>
    %cst = arith.constant dense<0.000000e+00> : vector<128x196xf32>
    %2 = tpu.matmul %0, %1, %cst {dimension_numbers = #tpu.dot_dimension_numbers<[1], [0], [0], [1], [0, 0, 1, 1], [], []>} : vector<128x1248xf32>, vector<1248x196xf32>, vector<128x196xf32> -> vector<128x196xf32>
    %cst_3 = arith.constant dense<0.000000e+00> : vector<128xf32>
    %3 = vector.multi_reduction <add>, %2, %cst_3 [1] : vector<128x196xf32> to vector<128xf32>
    %4 = vector.shape_cast %3 : vector<128xf32> to vector<128x1xf32>
    %cst_4 = arith.constant 1.960000e+02 : f32
    %5 = vector.broadcast %cst_4 : f32 to vector<128x1xf32>
    %6 = arith.divf %4, %5 : vector<128x1xf32>
    %7 = vector.broadcast %6 : vector<128x1xf32> to vector<128x196xf32>
    %8 = arith.subf %2, %7 : vector<128x196xf32>
    %9 = arith.mulf %8, %8 : vector<128x196xf32>
    %cst_5 = arith.constant dense<0.000000e+00> : vector<128xf32>
    %10 = vector.multi_reduction <add>, %9, %cst_5 [1] : vector<128x196xf32> to vector<128xf32>
    %11 = vector.shape_cast %10 : vector<128xf32> to vector<128x1xf32>
    %cst_6 = arith.constant 1.960000e+02 : f32
    %12 = vector.broadcast %cst_6 : f32 to vector<128x1xf32>
    %13 = arith.divf %11, %12 : vector<128x1xf32>
    %cst_7 = arith.constant 9.99999974E-6 : f32
    %14 = vector.broadcast %cst_7 : f32 to vector<128x1xf32>
    %15 = arith.addf %13, %14 : vector<128x1xf32>
    %16 = math.rsqrt %15 : vector<128x1xf32>
    %c0_8 = arith.constant 0 : index
    %c0_9 = arith.constant 0 : index
    %17 = vector.load %arg2[%c0_8, %c0_9] : memref<1x128xf32, #tpu.memory_space<vmem>>, vector<1x128xf32>
    %18 = tpu.transpose %17, [1, 0] : vector<1x128xf32> -> vector<128x1xf32>
    %c0_10 = arith.constant 0 : index
    %c0_11 = arith.constant 0 : index
    %19 = vector.load %arg3[%c0_10, %c0_11] : memref<1x128xf32, #tpu.memory_space<vmem>>, vector<1x128xf32>
    %20 = tpu.transpose %19, [1, 0] : vector<1x128xf32> -> vector<128x1xf32>
    %21 = arith.mulf %18, %16 : vector<128x1xf32>
    %22 = vector.broadcast %21 : vector<128x1xf32> to vector<128x196xf32>
    %23 = arith.mulf %8, %22 : vector<128x196xf32>
    %24 = vector.broadcast %20 : vector<128x1xf32> to vector<128x196xf32>
    %25 = arith.addf %23, %24 : vector<128x196xf32>
    %cst_12 = arith.constant 0.000000e+00 : f32
    %26 = vector.broadcast %cst_12 : f32 to vector<128x196xf32>
    %27 = arith.maximumf %25, %26 : vector<128x196xf32>
    %c0_13 = arith.constant 0 : index
    %c0_14 = arith.constant 0 : index
    %28 = vector.load %arg4[%c0_13, %c0_14] : memref<128x196xf32, #tpu.memory_space<vmem>>, vector<128x196xf32>
    tpu.vector_store %arg4[%c0_13, %c0_14], %27 {strides = array<i32>} : memref<128x196xf32, #tpu.memory_space<vmem>>, vector<128x196xf32>,
    return
  }
}

</mosaic_0001>

<llo_original>
// kernel: conv_bn_relu.1
$region0: #{conv_bn_relu.1}
  #allocation0 [shape = 'u32[]', space=smem, size = 0x4, offset = 0x4, fixed_abs, tag = 'smem constant byte address 0x4 - core index']
  #allocation1 [shape = 'u32[72,128]{1,0:T(1,128)}', space=vmem, size = 0x9000, scoped, tag = 'internal scratch']
  %s0 = inlined_call_operand.vmem [shape: f32[128,1248], index: 0, kind: input, shape index: {}]
  %s1 = inlined_call_operand.vmem [shape: f32[1248,196], index: 1, kind: input, shape index: {}]
  %s2 = inlined_call_operand.vmem [shape: f32[1,128], index: 2, kind: input, shape index: {}]
  %s3 = inlined_call_operand.vmem [shape: f32[1,128], index: 3, kind: input, shape index: {}]
  %s4 = inlined_call_operand.vmem [shape: f32[128,196], index: 4, kind: output, shape index: {}]
  %s5 = sld [smem:[#allocation0]]
  $region26: #{conv_bn_relu.1} parent=0
    _
  %s7 = ssub.s32 1, %s5
  %s8 = scalar_select 0, %s7, %s5
  // Predicated region
  $region2: #{conv_bn_relu.1} parent=0 // pred_check
    _
  $region3: #{conv_bn_relu.1} parent=0 // pred_check_branch
    %10 = sbr.rel (0) target = $region5
  $region4: #{conv_bn_relu.1} parent=0 // pred_region
    _
  $region5: #{conv_bn_relu.1} parent=0 // pred_fallthru
    _
  // Predicated region
  $region6: #{conv_bn_relu.1} parent=0 // pred_check
    _
  $region7: #{conv_bn_relu.1} parent=0 // pred_check_branch
    %12 = sbr.rel (0) target = $region9
  $region8: #{conv_bn_relu.1} parent=0 // pred_region
    _
  $region9: #{conv_bn_relu.1} parent=0 // pred_fallthru
    _
  // Predicated region
  $region10: #{conv_bn_relu.1} parent=0 // pred_check
    _
  $region11: #{conv_bn_relu.1} parent=0 // pred_check_branch
    %14 = sbr.rel (0) target = $region13
  $region12: #{conv_bn_relu.1} parent=0 // pred_region
    _
  $region13: #{conv_bn_relu.1} parent=0 // pred_fallthru
    _
  // Predicated region
  $region14: #{conv_bn_relu.1} parent=0 // pred_check
    _
  $region15: #{conv_bn_relu.1} parent=0 // pred_check_branch
    %16 = sbr.rel (0) target = $region17
  $region16: #{conv_bn_relu.1} parent=0 // pred_region
    _
  $region17: #{conv_bn_relu.1} parent=0 // pred_fallthru
    _
  %v17 = vld [vmem:[%s0] sm:$0xff]
  %v18 = vld [vmem:[%s0 + $0x8] sm:$0xff]
  %v19 = vld [vmem:[%s0 + $0x10] sm:$0xff]
  %v20 = vld [vmem:[%s0 + $0x18] sm:$0xff]
  %v21 = vld [vmem:[%s0 + $0x20] sm:$0xff]
  %v22 = vld [vmem:[%s0 + $0x28] sm:$0xff]
  %v23 = vld [vmem:[%s0 + $0x30] sm:$0xff]
  %v24 = vld [vmem:[%s0 + $0x38] sm:$0xff]
  %v25 = vld [vmem:[%s0 + $0x40] sm:$0xff]
  %v26 = vld [vmem:[%s0 + $0x48] sm:$0xff]
  %v27 = vld [vmem:[%s0 + $0x50] sm:$0xff]
  %v28 = vld [vmem:[%s0 + $0x58] sm:$0xff]
  %v29 = vld [vmem:[%s0 + $0x60] sm:$0xff]
  %v30 = vld [vmem:[%s0 + $0x68] sm:$0xff]
  %v31 = vld [vmem:[%s0 + $0x70] sm:$0xff]
  %v32 = vld [vmem:[%s0 + $0x78] sm:$0xff]
  %v33 = vld [vmem:[%s0 + $0x80] sm:$0xff]
  %v34 = vld [vmem:[%s0 + $0x88] sm:$0xff]
  %v35 = vld [vmem:[%s0 + $0x90] sm:$0xff]
  %v36 = vld [vmem:[%s0 + $0x98] sm:$0xff]
  %v37 = vld [vmem:[%s0 + $0xa0] sm:$0xff]
  %v38 = vld [vmem:[%s0 + $0xa8] sm:$0xff]
  %v39 = vld [vmem:[%s0 + $0xb0] sm:$0xff]
  %v40 = vld [vmem:[%s0 + $0xb8] sm:$0xff]
  %v41 = vld [vmem:[%s0 + $0xc0] sm:$0xff]
  %v42 = vld [vmem:[%s0 + $0xc8] sm:$0xff]
  %v43 = vld [vmem:[%s0 + $0xd0] sm:$0xff]
  %v44 = vld [vmem:[%s0 + $0xd8] sm:$0xff]
  %v45 = vld [vmem:[%s0 + $0xe0] sm:$0xff]
  %v46 = vld [vmem:[%s0 + $0xe8] sm:$0xff]
  %v47 = vld [vmem:[%s0 + $0xf0] sm:$0xff]
  %v48 = vld [vmem:[%s0 + $0xf8] sm:$0xff]
  %v49 = vld [vmem:[%s0 + $0x100] sm:$0xff]
  %v50 = vld [vmem:[%s0 + $0x108] sm:$0xff]
  %v51 = vld [vmem:[%s0 + $0x110] sm:$0xff]
  %v52 = vld [vmem:[%s0 + $0x118] sm:$0xff]
  %v53 = vld [vmem:[%s0 + $0x120] sm:$0xff]
  %v54 = vld [vmem:[%s0 + $0x128] sm:$0xff]
  %v55 = vld [vmem:[%s0 + $0x130] sm:$0xff]
  %v56 = vld [vmem:[%s0 + $0x138] sm:$0xff]
  %v57 = vld [vmem:[%s0 + $0x140] sm:$0xff]
  %v58 = vld [vmem:[%s0 + $0x148] sm:$0xff]
  %v59 = vld [vmem:[%s0 + $0x150] sm:$0xff]
  %v60 = vld [vmem:[%s0 + $0x158] sm:$0xff]
  %v61 = vld [vmem:[%s0 + $0x160] sm:$0xff]
  %v62 = vld [vmem:[%s0 + $0x168] sm:$0xff]
  %v63 = vld [vmem:[%s0 + $0x170] sm:$0xff]
  %v64 = vld [vmem:[%s0 + $0x178] sm:$0xff]
  %v65 = vld [vmem:[%s0 + $0x180] sm:$0xff]
  %v66 = vld [vmem:[%s0 + $0x188] sm:$0xff]
  %v67 = vld [vmem:[%s0 + $0x190] sm:$0xff]
  %v68 = vld [vmem:[%s0 + $0x198] sm:$0xff]
  %v69 = vld [vmem:[%s0 + $0x1a0] sm:$0xff]
  %v70 = vld [vmem:[%s0 + $0x1a8] sm:$0xff]
  %v71 = vld [vmem:[%s0 + $0x1b0] sm:$0xff]
  %v72 = vld [vmem:[%s0 + $0x1b8] sm:$0xff]
  %v73 = vld [vmem:[%s0 + $0x1c0] sm:$0xff]
  %v74 = vld [vmem:[%s0 + $0x1c8] sm:$0xff]
  %v75 = vld [vmem:[%s0 + $0x1d0] sm:$0xff]
  %v76 = vld [vmem:[%s0 + $0x1d8] sm:$0xff]
  %v77 = vld [vmem:[%s0 + $0x1e0] sm:$0xff]
  %v78 = vld [vmem:[%s0 + $0x1e8] sm:$0xff]
  %v79 = vld [vmem:[%s0 + $0x1f0] sm:$0xff]
  %v80 = vld [vmem:[%s0 + $0x1f8] sm:$0xff]
  %v81 = vld [vmem:[%s0 + $0x200] sm:$0xff]
  %v82 = vld [vmem:[%s0 + $0x208] sm:$0xff]
  %v83 = vld [vmem:[%s0 + $0x210] sm:$0xff]
  %v84 = vld [vmem:[%s0 + $0x218] sm:$0xff]
  %v85 = vld [vmem:[%s0 + $0x220] sm:$0xff]
  %v86 = vld [vmem:[%s0 + $0x228] sm:$0xff]
  %v87 = vld [vmem:[%s0 + $0x230] sm:$0xff]
  %v88 = vld [vmem:[%s0 + $0x238] sm:$0xff]
  %v89 = vld [vmem:[%s0 + $0x240] sm:$0xff]
  %v90 = vld [vmem:[%s0 + $0x248] sm:$0xff]
  %v91 = vld [vmem:[%s0 + $0x250] sm:$0xff]
  %v92 = vld [vmem:[%s0 + $0x258] sm:$0xff]
  %v93 = vld [vmem:[%s0 + $0x260] sm:$0xff]
  %v94 = vld [vmem:[%s0 + $0x268] sm:$0xff]
  %v95 = vld [vmem:[%s0 + $0x270] sm:$0xff]
  %v96 = vld [vmem:[%s0 + $0x278] sm:$0xff]
  %v97 = vld [vmem:[%s0 + $0x280] sm:$0xff]
  %v98 = vld [vmem:[%s0 + $0x288] sm:$0xff]
  %v99 = vld [vmem:[%s0 + $0x290] sm:$0xff]
  %v100 = vld [vmem:[%s0 + $0x298] sm:$0xff]
  %v101 = vld [vmem:[%s0 + $0x2a0] sm:$0xff]
  %v102 = vld [vmem:[%s0 + $0x2a8] sm:$0xff]
  %v103 = vld [vmem:[%s0 + $0x2b0] sm:$0xff]
  %v104 = vld [vmem:[%s0 + $0x2b8] sm:$0xff]
  %v105 = vld [vmem:[%s0 + $0x2c0] sm:$0xff]
  %v106 = vld [vmem:[%s0 + $0x2c8] sm:$0xff]
  %v107 = vld [vmem:[%s0 + $0x2d0] sm:$0xff]
  %v108 = vld [vmem:[%s0 + $0x2d8] sm:$0xff]
  %v109 = vld [vmem:[%s0 + $0x2e0] sm:$0xff]
  %v110 = vld [vmem:[%s0 + $0x2e8] sm:$0xff]
  %v111 = vld [vmem:[%s0 + $0x2f0] sm:$0xff]
  %v112 = vld [vmem:[%s0 + $0x2f8] sm:$0xff]
  %v113 = vld [vmem:[%s0 + $0x300] sm:$0xff]
  %v114 = vld [vmem:[%s0 + $0x308] sm:$0xff]
  %v115 = vld [vmem:[%s0 + $0x310] sm:$0xff]
  %v116 = vld [vmem:[%s0 + $0x318] sm:$0xff]
  %v117 = vld [vmem:[%s0 + $0x320] sm:$0xff]
  %v118 = vld [vmem:[%s0 + $0x328] sm:$0xff]
  %v119 = vld [vmem:[%s0 + $0x330] sm:$0xff]
  %v120 = vld [vmem:[%s0 + $0x338] sm:$0xff]
  %v121 = vld [vmem:[%s0 + $0x340] sm:$0xff]
  %v122 = vld [vmem:[%s0 + $0x348] sm:$0xff]
  %v123 = vld [vmem:[%s0 + $0x350] sm:$0xff]
  %v124 = vld [vmem:[%s0 + $0x358] sm:$0xff]
  %v125 = vld [vmem:[%s0 + $0x360] sm:$0xff]
  %v126 = vld [vmem:[%s0 + $0x368] sm:$0xff]
  %v127 = vld [vmem:[%s0 + $0x370] sm:$0xff]
  %v128 = vld [vmem:[%s0 + $0x378] sm:$0xff]
  %v129 = vld [vmem:[%s0 + $0x380] sm:$0xff]
  %v130 = vld [vmem:[%s0 + $0x388] sm:$0xff]
  %v131 = vld [vmem:[%s0 + $0x390] sm:$0xff]
  %v132 = vld [vmem:[%s0 + $0x398] sm:$0xff]
  %v133 = vld [vmem:[%s0 + $0x3a0] sm:$0xff]
  %v134 = vld [vmem:[%s0 + $0x3a8] sm:$0xff]
  %v135 = vld [vmem:[%s0 + $0x3b0] sm:$0xff]
  %v136 = vld [vmem:[%s0 + $0x3b8] sm:$0xff]
  %v137 = vld [vmem:[%s0 + $0x3c0] sm:$0xff]
  %v138 = vld [vmem:[%s0 + $0x3c8] sm:$0xff]
  %v139 = vld [vmem:[%s0 + $0x3d0] sm:$0xff]
  %v140 = vld [vmem:[%s0 + $0x3d8] sm:$0xff]
  %v141 = vld [vmem:[%s0 + $0x3e0] sm:$0xff]
  %v142 = vld [vmem:[%s0 + $0x3e8] sm:$0xff]
  %v143 = vld [vmem:[%s0 + $0x3f0] sm:$0xff]
  %v144 = vld [vmem:[%s0 + $0x3f8] sm:$0xff]
  %v145 = vld [vmem:[%s0 + $0x400] sm:$0xff]
  %v146 = vld [vmem:[%s0 + $0x408] sm:$0xff]
  %v147 = vld [vmem:[%s0 + $0x410] sm:$0xff]
  %v148 = vld [vmem:[%s0 + $0x418] sm:$0xff]
  %v149 = vld [vmem:[%s0 + $0x420] sm:$0xff]
  %v150 = vld [vmem:[%s0 + $0x428] sm:$0xff]
  %v151 = vld [vmem:[%s0 + $0x430] sm:$0xff]
  %v152 = vld [vmem:[%s0 + $0x438] sm:$0xff]
  %v153 = vld [vmem:[%s0 + $0x440] sm:$0xff]
  %v154 = vld [vmem:[%s0 + $0x448] sm:$0xff]
  %v155 = vld [vmem:[%s0 + $0x450] sm:$0xff]
  %v156 = vld [vmem:[%s0 + $0x458] sm:$0xff]
  %v157 = vld [vmem:[%s0 + $0x460] sm:$0xff]
  %v158 = vld [vmem:[%s0 + $0x468] sm:$0xff]
  %v159 = vld [vmem:[%s0 + $0x470] sm:$0xff]
  %v160 = vld [vmem:[%s0 + $0x478] sm:$0xff]
  %v161 = vld [vmem:[%s0 + $0x480] sm:$0xff]
  %v162 = vld [vmem:[%s0 + $0x488] sm:$0xff]
  %v163 = vld [vmem:[%s0 + $0x490] sm:$0xff]
  %v164 = vld [vmem:[%s0 + $0x498] sm:$0xff]
  %v165 = vld [vmem:[%s0 + $0x4a0] sm:$0xff]
  %v166 = vld [vmem:[%s0 + $0x4a8] sm:$0xff]
  %v167 = vld [vmem:[%s0 + $0x4b0] sm:$0xff]
  %v168 = vld [vmem:[%s0 + $0x4b8] sm:$0xff]
  %v169 = vld [vmem:[%s0 + $0x4c0] sm:$0xff]
  %v170 = vld [vmem:[%s0 + $0x4c8] sm:$0xff]
  %v171 = vld [vmem:[%s0 + $0x4d0] sm:$0xff]
  %v172 = vld [vmem:[%s0 + $0x4d8] sm:$0xff]
  %v173 = vld [vmem:[%s0 + $0x4e0] sm:$0xff]
  %v174 = vld [vmem:[%s0 + $0x4e8] sm:$0xff]
  %v175 = vld [vmem:[%s0 + $0x4f0] sm:$0xff]
  %v176 = vld [vmem:[%s0 + $0x4f8] sm:$0xff]
  %v177 = vld [vmem:[%s1] sm:$0xff]
  %v178 = vld [vmem:[%s1 + $0x8] sm:$0xff]
  %v179 = vld [vmem:[%s1 + $0x10] sm:$0xff]
  %v180 = vld [vmem:[%s1 + $0x18] sm:$0xff]
  %v181 = vld [vmem:[%s1 + $0x20] sm:$0xff]
  %v182 = vld [vmem:[%s1 + $0x28] sm:$0xff]
  %v183 = vld [vmem:[%s1 + $0x30] sm:$0xff]
  %v184 = vld [vmem:[%s1 + $0x38] sm:$0xff]
  %v185 = vld [vmem:[%s1 + $0x40] sm:$0xff]
  %v186 = vld [vmem:[%s1 + $0x48] sm:$0xff]
  %v187 = vld [vmem:[%s1 + $0x50] sm:$0xff]
  %v188 = vld [vmem:[%s1 + $0x58] sm:$0xff]
  %v189 = vld [vmem:[%s1 + $0x60] sm:$0xff]
  %v190 = vld [vmem:[%s1 + $0x68] sm:$0xff]
  %v191 = vld [vmem:[%s1 + $0x70] sm:$0xff]
  %v192 = vld [vmem:[%s1 + $0x78] sm:$0xff]
  %v193 = vld [vmem:[%s1 + $0x80] sm:$0xff]
  %v194 = vld [vmem:[%s1 + $0x88] sm:$0xff]
  %v195 = vld [vmem:[%s1 + $0x90] sm:$0xff]
  %v196 = vld [vmem:[%s1 + $0x98] sm:$0xff]
  %v197 = vld [vmem:[%s1 + $0xa0] sm:$0xff]
  %v198 = vld [vmem:[%s1 + $0xa8] sm:$0xff]
  %v199 = vld [vmem:[%s1 + $0xb0] sm:$0xff]
  %v200 = vld [vmem:[%s1 + $0xb8] sm:$0xff]
  %v201 = vld [vmem:[%s1 + $0xc0] sm:$0xff]
  %v202 = vld [vmem:[%s1 + $0xc8] sm:$0xff]
  %v203 = vld [vmem:[%s1 + $0xd0] sm:$0xff]
  %v204 = vld [vmem:[%s1 + $0xd8] sm:$0xff]
  %v205 = vld [vmem:[%s1 + $0xe0] sm:$0xff]
  %v206 = vld [vmem:[%s1 + $0xe8] sm:$0xff]
  %v207 = vld [vmem:[%s1 + $0xf0] sm:$0xff]
  %v208 = vld [vmem:[%s1 + $0xf8] sm:$0xff]
  %v209 = vld [vmem:[%s1 + $0x100] sm:$0xff]
  %v210 = vld [vmem:[%s1 + $0x108] sm:$0xff]
  %v211 = vld [vmem:[%s1 + $0x110] sm:$0xff]
  %v212 = vld [vmem:[%s1 + $0x118] sm:$0xff]
  %v213 = vld [vmem:[%s1 + $0x120] sm:$0xff]
  %v214 = vld [vmem:[%s1 + $0x128] sm:$0xff]
  %v215 = vld [vmem:[%s1 + $0x130] sm:$0xff]
  %v216 = vld [vmem:[%s1 + $0x138] sm:$0xff]
  %v217 = vld [vmem:[%s1 + $0x140] sm:$0xff]
  %v218 = vld [vmem:[%s1 + $0x148] sm:$0xff]
  %v219 = vld [vmem:[%s1 + $0x150] sm:$0xff]
  %v220 = vld [vmem:[%s1 + $0x158] sm:$0xff]
  %v221 = vld [vmem:[%s1 + $0x160] sm:$0xff]
  %v222 = vld [vmem:[%s1 + $0x168] sm:$0xff]
  %v223 = vld [vmem:[%s1 + $0x170] sm:$0xff]
  %v224 = vld [vmem:[%s1 + $0x178] sm:$0xff]
  %v225 = vld [vmem:[%s1 + $0x180] sm:$0xff]
  %v226 = vld [vmem:[%s1 + $0x188] sm:$0xff]
  %v227 = vld [vmem:[%s1 + $0x190] sm:$0xff]
  %v228 = vld [vmem:[%s1 + $0x198] sm:$0xff]
  %v229 = vld [vmem:[%s1 + $0x1a0] sm:$0xff]
  %v230 = vld [vmem:[%s1 + $0x1a8] sm:$0xff]
  %v231 = vld [vmem:[%s1 + $0x1b0] sm:$0xff]
  %v232 = vld [vmem:[%s1 + $0x1b8] sm:$0xff]
  %v233 = vld [vmem:[%s1 + $0x1c0] sm:$0xff]
  %v234 = vld [vmem:[%s1 + $0x1c8] sm:$0xff]
  %v235 = vld [vmem:[%s1 + $0x1d0] sm:$0xff]
  %v236 = vld [vmem:[%s1 + $0x1d8] sm:$0xff]
  %v237 = vld [vmem:[%s1 + $0x1e0] sm:$0xff]
  %v238 = vld [vmem:[%s1 + $0x1e8] sm:$0xff]
  %v239 = vld [vmem:[%s1 + $0x1f0] sm:$0xff]
  %v240 = vld [vmem:[%s1 + $0x1f8] sm:$0xff]
  %v241 = vld [vmem:[%s1 + $0x200] sm:$0xff]
  %v242 = vld [vmem:[%s1 + $0x208] sm:$0xff]
  %v243 = vld [vmem:[%s1 + $0x210] sm:$0xff]
  %v244 = vld [vmem:[%s1 + $0x218] sm:$0xff]
  %v245 = vld [vmem:[%s1 + $0x220] sm:$0xff]
  %v246 = vld [vmem:[%s1 + $0x228] sm:$0xff]
  %v247 = vld [vmem:[%s1 + $0x230] sm:$0xff]
  %v248 = vld [vmem:[%s1 + $0x238] sm:$0xff]
  %v249 = vld [vmem:[%s1 + $0x240] sm:$0xff]
  %v250 = vld [vmem:[%s1 + $0x248] sm:$0xff]
  %v251 = vld [vmem:[%s1 + $0x250] sm:$0xff]
  %v252 = vld [vmem:[%s1 + $0x258] sm:$0xff]
  %v253 = vld [vmem:[%s1 + $0x260] sm:$0xff]
  %v254 = vld [vmem:[%s1 + $0x268] sm:$0xff]
  %v255 = vld [vmem:[%s1 + $0x270] sm:$0xff]
  %v256 = vld [vmem:[%s1 + $0x278] sm:$0xff]
  %v257 = vld [vmem:[%s1 + $0x280] sm:$0xff]
  %v258 = vld [vmem:[%s1 + $0x288] sm:$0xff]
  %v259 = vld [vmem:[%s1 + $0x290] sm:$0xff]
  %v260 = vld [vmem:[%s1 + $0x298] sm:$0xff]
  %v261 = vld [vmem:[%s1 + $0x2a0] sm:$0xff]
  %v262 = vld [vmem:[%s1 + $0x2a8] sm:$0xff]
  %v263 = vld [vmem:[%s1 + $0x2b0] sm:$0xff]
  %v264 = vld [vmem:[%s1 + $0x2b8] sm:$0xff]
  %v265 = vld [vmem:[%s1 + $0x2c0] sm:$0xff]
  %v266 = vld [vmem:[%s1 + $0x2c8] sm:$0xff]
  %v267 = vld [vmem:[%s1 + $0x2d0] sm:$0xff]
  %v268 = vld [vmem:[%s1 + $0x2d8] sm:$0xff]
  %v269 = vld [vmem:[%s1 + $0x2e0] sm:$0xff]
  %v270 = vld [vmem:[%s1 + $0x2e8] sm:$0xff]
  %v271 = vld [vmem:[%s1 + $0x2f0] sm:$0xff]
  %v272 = vld [vmem:[%s1 + $0x2f8] sm:$0xff]
  %v273 = vld [vmem:[%s1 + $0x300] sm:$0xff]
  %v274 = vld [vmem:[%s1 + $0x308] sm:$0xff]
  %v275 = vld [vmem:[%s1 + $0x310] sm:$0xff]
  %v276 = vld [vmem:[%s1 + $0x318] sm:$0xff]
  %v277 = vld [vmem:[%s1 + $0x320] sm:$0xff]
  %v278 = vld [vmem:[%s1 + $0x328] sm:$0xff]
  %v279 = vld [vmem:[%s1 + $0x330] sm:$0xff]
  %v280 = vld [vmem:[%s1 + $0x338] sm:$0xff]
  %v281 = vld [vmem:[%s1 + $0x340] sm:$0xff]
  %v282 = vld [vmem:[%s1 + $0x348] sm:$0xff]
  %v283 = vld [vmem:[%s1 + $0x350] sm:$0xff]
  %v284 = vld [vmem:[%s1 + $0x358] sm:$0xff]
  %v285 = vld [vmem:[%s1 + $0x360] sm:$0xff]
  %v286 = vld [vmem:[%s1 + $0x368] sm:$0xff]
  %v287 = vld [vmem:[%s1 + $0x370] sm:$0xff]
  %v288 = vld [vmem:[%s1 + $0x378] sm:$0xff]
  %v289 = vld [vmem:[%s1 + $0x380] sm:$0xff]
  %v290 = vld [vmem:[%s1 + $0x388] sm:$0xff]
  %v291 = vld [vmem:[%s1 + $0x390] sm:$0xff]
  %v292 = vld [vmem:[%s1 + $0x398] sm:$0xff]
  %v293 = vld [vmem:[%s1 + $0x3a0] sm:$0xff]
  %v294 = vld [vmem:[%s1 + $0x3a8] sm:$0xff]
  %v295 = vld [vmem:[%s1 + $0x3b0] sm:$0xff]
  %v296 = vld [vmem:[%s1 + $0x3b8] sm:$0xff]
  %v297 = vld [vmem:[%s1 + $0x3c0] sm:$0xff]
  %v298 = vld [vmem:[%s1 + $0x3c8] sm:$0xff]
  %v299 = vld [vmem:[%s1 + $0x3d0] sm:$0xff]
  %v300 = vld [vmem:[%s1 + $0x3d8] sm:$0xff]
  %v301 = vld [vmem:[%s1 + $0x3e0] sm:$0xff]
  %v302 = vld [vmem:[%s1 + $0x3e8] sm:$0xff]
  %v303 = vld [vmem:[%s1 + $0x3f0] sm:$0xff]
  %v304 = vld [vmem:[%s1 + $0x3f8] sm:$0xff]
  %v305 = vld [vmem:[%s1 + $0x400] sm:$0xff]
  %v306 = vld [vmem:[%s1 + $0x408] sm:$0xff]
  %v307 = vld [vmem:[%s1 + $0x410] sm:$0xff]
  %v308 = vld [vmem:[%s1 + $0x418] sm:$0xff]
  %v309 = vld [vmem:[%s1 + $0x420] sm:$0xff]
  %v310 = vld [vmem:[%s1 + $0x428] sm:$0xff]
  %v311 = vld [vmem:[%s1 + $0x430] sm:$0xff]
  %v312 = vld [vmem:[%s1 + $0x438] sm:$0xff]
  %v313 = vld [vmem:[%s1 + $0x440] sm:$0xff]
  %v314 = vld [vmem:[%s1 + $0x448] sm:$0xff]
  %v315 = vld [vmem:[%s1 + $0x450] sm:$0xff]
  %v316 = vld [vmem:[%s1 + $0x458] sm:$0xff]
  %v317 = vld [vmem:[%s1 + $0x460] sm:$0xff]
  %v318 = vld [vmem:[%s1 + $0x468] sm:$0xff]
  %v319 = vld [vmem:[%s1 + $0x470] sm:$0xff]
  %v320 = vld [vmem:[%s1 + $0x478] sm:$0xff]
  %v321 = vld [vmem:[%s1 + $0x480] sm:$0xff]
  %v322 = vld [vmem:[%s1 + $0x488] sm:$0xff]
  %v323 = vld [vmem:[%s1 + $0x490] sm:$0xff]
  %v324 = vld [vmem:[%s1 + $0x498] sm:$0xff]
  %v325 = vld [vmem:[%s1 + $0x4a0] sm:$0xff]
  %v326 = vld [vmem:[%s1 + $0x4a8] sm:$0xff]
  %v327 = vld [vmem:[%s1 + $0x4b0] sm:$0xff]
  %v328 = vld [vmem:[%s1 + $0x4b8] sm:$0xff]
  %v329 = vld [vmem:[%s1 + $0x4c0] sm:$0xff]
  %v330 = vld [vmem:[%s1 + $0x4c8] sm:$0xff]
  %v331 = vld [vmem:[%s1 + $0x4d0] sm:$0xff]
  %v332 = vld [vmem:[%s1 + $0x4d8] sm:$0xff]
  %v333 = vld [vmem:[%s1 + $0x4e0] sm:$0xff]
  %v334 = vld [vmem:[%s1 + $0x4e8] sm:$0xff]
  %v335 = vld [vmem:[%s1 + $0x4f0] sm:$0xff]
  %v336 = vld [vmem:[%s1 + $0x4f8] sm:$0xff]
  %v337 = vld [vmem:[%s1 + $0x500] sm:$0xff]
  %v338 = vld [vmem:[%s1 + $0x508] sm:$0xff]
  %v339 = vld [vmem:[%s1 + $0x510] sm:$0xff]
  %v340 = vld [vmem:[%s1 + $0x518] sm:$0xff]
  %v341 = vld [vmem:[%s1 + $0x520] sm:$0xff]
  %v342 = vld [vmem:[%s1 + $0x528] sm:$0xff]
  %v343 = vld [vmem:[%s1 + $0x530] sm:$0xff]
  %v344 = vld [vmem:[%s1 + $0x538] sm:$0xff]
  %v345 = vld [vmem:[%s1 + $0x540] sm:$0xff]
  %v346 = vld [vmem:[%s1 + $0x548] sm:$0xff]
  %v347 = vld [vmem:[%s1 + $0x550] sm:$0xff]
  %v348 = vld [vmem:[%s1 + $0x558] sm:$0xff]
  %v349 = vld [vmem:[%s1 + $0x560] sm:$0xff]
  %v350 = vld [vmem:[%s1 + $0x568] sm:$0xff]
  %v351 = vld [vmem:[%s1 + $0x570] sm:$0xff]
  %v352 = vld [vmem:[%s1 + $0x578] sm:$0xff]
  %v353 = vld [vmem:[%s1 + $0x580] sm:$0xff]
  %v354 = vld [vmem:[%s1 + $0x588] sm:$0xff]
  %v355 = vld [vmem:[%s1 + $0x590] sm:$0xff]
  %v356 = vld [vmem:[%s1 + $0x598] sm:$0xff]
  %v357 = vld [vmem:[%s1 + $0x5a0] sm:$0xff]
  %v358 = vld [vmem:[%s1 + $0x5a8] sm:$0xff]
  %v359 = vld [vmem:[%s1 + $0x5b0] sm:$0xff]
  %v360 = vld [vmem:[%s1 + $0x5b8] sm:$0xff]
  %v361 = vld [vmem:[%s1 + $0x5c0] sm:$0xff]
  %v362 = vld [vmem:[%s1 + $0x5c8] sm:$0xff]
  %v363 = vld [vmem:[%s1 + $0x5d0] sm:$0xff]
  %v364 = vld [vmem:[%s1 + $0x5d8] sm:$0xff]
  %v365 = vld [vmem:[%s1 + $0x5e0] sm:$0xff]
  %v366 = vld [vmem:[%s1 + $0x5e8] sm:$0xff]
  %v367 = vld [vmem:[%s1 + $0x5f0] sm:$0xff]
  %v368 = vld [vmem:[%s1 + $0x5f8] sm:$0xff]
  %v369 = vld [vmem:[%s1 + $0x600] sm:$0xff]
  %v370 = vld [vmem:[%s1 + $0x608] sm:$0xff]
  %v371 = vld [vmem:[%s1 + $0x610] sm:$0xff]
  %v372 = vld [vmem:[%s1 + $0x618] sm:$0xff]
  %v373 = vld [vmem:[%s1 + $0x620] sm:$0xff]
  %v374 = vld [vmem:[%s1 + $0x628] sm:$0xff]
  %v375 = vld [vmem:[%s1 + $0x630] sm:$0xff]
  %v376 = vld [vmem:[%s1 + $0x638] sm:$0xff]
  %v377 = vld [vmem:[%s1 + $0x640] sm:$0xff]
  %v378 = vld [vmem:[%s1 + $0x648] sm:$0xff]
  %v379 = vld [vmem:[%s1 + $0x650] sm:$0xff]
  %v380 = vld [vmem:[%s1 + $0x658] sm:$0xff]
  %v381 = vld [vmem:[%s1 + $0x660] sm:$0xff]
  %v382 = vld [vmem:[%s1 + $0x668] sm:$0xff]
  %v383 = vld [vmem:[%s1 + $0x670] sm:$0xff]
  %v384 = vld [vmem:[%s1 + $0x678] sm:$0xff]
  %v385 = vld [vmem:[%s1 + $0x680] sm:$0xff]
  %v386 = vld [vmem:[%s1 + $0x688] sm:$0xff]
  %v387 = vld [vmem:[%s1 + $0x690] sm:$0xff]
  %v388 = vld [vmem:[%s1 + $0x698] sm:$0xff]
  %v389 = vld [vmem:[%s1 + $0x6a0] sm:$0xff]
  %v390 = vld [vmem:[%s1 + $0x6a8] sm:$0xff]
  %v391 = vld [vmem:[%s1 + $0x6b0] sm:$0xff]
  %v392 = vld [vmem:[%s1 + $0x6b8] sm:$0xff]
  %v393 = vld [vmem:[%s1 + $0x6c0] sm:$0xff]
  %v394 = vld [vmem:[%s1 + $0x6c8] sm:$0xff]
  %v395 = vld [vmem:[%s1 + $0x6d0] sm:$0xff]
  %v396 = vld [vmem:[%s1 + $0x6d8] sm:$0xff]
  %v397 = vld [vmem:[%s1 + $0x6e0] sm:$0xff]
  %v398 = vld [vmem:[%s1 + $0x6e8] sm:$0xff]
  %v399 = vld [vmem:[%s1 + $0x6f0] sm:$0xff]
  %v400 = vld [vmem:[%s1 + $0x6f8] sm:$0xff]
  %v401 = vld [vmem:[%s1 + $0x700] sm:$0xff]
  %v402 = vld [vmem:[%s1 + $0x708] sm:$0xff]
  %v403 = vld [vmem:[%s1 + $0x710] sm:$0xff]
  %v404 = vld [vmem:[%s1 + $0x718] sm:$0xff]
  %v405 = vld [vmem:[%s1 + $0x720] sm:$0xff]
  %v406 = vld [vmem:[%s1 + $0x728] sm:$0xff]
  %v407 = vld [vmem:[%s1 + $0x730] sm:$0xff]
  %v408 = vld [vmem:[%s1 + $0x738] sm:$0xff]
  %v409 = vld [vmem:[%s1 + $0x740] sm:$0xff]
  %v410 = vld [vmem:[%s1 + $0x748] sm:$0xff]
  %v411 = vld [vmem:[%s1 + $0x750] sm:$0xff]
  %v412 = vld [vmem:[%s1 + $0x758] sm:$0xff]
  %v413 = vld [vmem:[%s1 + $0x760] sm:$0xff]
  %v414 = vld [vmem:[%s1 + $0x768] sm:$0xff]
  %v415 = vld [vmem:[%s1 + $0x770] sm:$0xff]
  %v416 = vld [vmem:[%s1 + $0x778] sm:$0xff]
  %v417 = vld [vmem:[%s1 + $0x780] sm:$0xff]
  %v418 = vld [vmem:[%s1 + $0x788] sm:$0xff]
  %v419 = vld [vmem:[%s1 + $0x790] sm:$0xff]
  %v420 = vld [vmem:[%s1 + $0x798] sm:$0xff]
  %v421 = vld [vmem:[%s1 + $0x7a0] sm:$0xff]
  %v422 = vld [vmem:[%s1 + $0x7a8] sm:$0xff]
  %v423 = vld [vmem:[%s1 + $0x7b0] sm:$0xff]
  %v424 = vld [vmem:[%s1 + $0x7b8] sm:$0xff]
  %v425 = vld [vmem:[%s1 + $0x7c0] sm:$0xff]
  %v426 = vld [vmem:[%s1 + $0x7c8] sm:$0xff]
  %v427 = vld [vmem:[%s1 + $0x7d0] sm:$0xff]
  %v428 = vld [vmem:[%s1 + $0x7d8] sm:$0xff]
  %v429 = vld [vmem:[%s1 + $0x7e0] sm:$0xff]
  %v430 = vld [vmem:[%s1 + $0x7e8] sm:$0xff]
  %v431 = vld [vmem:[%s1 + $0x7f0] sm:$0xff]
  %v432 = vld [vmem:[%s1 + $0x7f8] sm:$0xff]
  %v433 = vld [vmem:[%s1 + $0x800] sm:$0xff]
  %v434 = vld [vmem:[%s1 + $0x808] sm:$0xff]
  %v435 = vld [vmem:[%s1 + $0x810] sm:$0xff]
  %v436 = vld [vmem:[%s1 + $0x818] sm:$0xff]
  %v437 = vld [vmem:[%s1 + $0x820] sm:$0xff]
  %v438 = vld [vmem:[%s1 + $0x828] sm:$0xff]
  %v439 = vld [vmem:[%s1 + $0x830] sm:$0xff]
  %v440 = vld [vmem:[%s1 + $0x838] sm:$0xff]
  %v441 = vld [vmem:[%s1 + $0x840] sm:$0xff]
  %v442 = vld [vmem:[%s1 + $0x848] sm:$0xff]
  %v443 = vld [vmem:[%s1 + $0x850] sm:$0xff]
  %v444 = vld [vmem:[%s1 + $0x858] sm:$0xff]
  %v445 = vld [vmem:[%s1 + $0x860] sm:$0xff]
  %v446 = vld [vmem:[%s1 + $0x868] sm:$0xff]
  %v447 = vld [vmem:[%s1 + $0x870] sm:$0xff]
  %v448 = vld [vmem:[%s1 + $0x878] sm:$0xff]
  %v449 = vld [vmem:[%s1 + $0x880] sm:$0xff]
  %v450 = vld [vmem:[%s1 + $0x888] sm:$0xff]
  %v451 = vld [vmem:[%s1 + $0x890] sm:$0xff]
  %v452 = vld [vmem:[%s1 + $0x898] sm:$0xff]
  %v453 = vld [vmem:[%s1 + $0x8a0] sm:$0xff]
  %v454 = vld [vmem:[%s1 + $0x8a8] sm:$0xff]
  %v455 = vld [vmem:[%s1 + $0x8b0] sm:$0xff]
  %v456 = vld [vmem:[%s1 + $0x8b8] sm:$0xff]
  %v457 = vld [vmem:[%s1 + $0x8c0] sm:$0xff]
  %v458 = vld [vmem:[%s1 + $0x8c8] sm:$0xff]
  %v459 = vld [vmem:[%s1 + $0x8d0] sm:$0xff]
  %v460 = vld [vmem:[%s1 + $0x8d8] sm:$0xff]
  %v461 = vld [vmem:[%s1 + $0x8e0] sm:$0xff]
  %v462 = vld [vmem:[%s1 + $0x8e8] sm:$0xff]
  %v463 = vld [vmem:[%s1 + $0x8f0] sm:$0xff]
  %v464 = vld [vmem:[%s1 + $0x8f8] sm:$0xff]
  %v465 = vld [vmem:[%s1 + $0x900] sm:$0xff]
  %v466 = vld [vmem:[%s1 + $0x908] sm:$0xff]
  %v467 = vld [vmem:[%s1 + $0x910] sm:$0xff]
  %v468 = vld [vmem:[%s1 + $0x918] sm:$0xff]
  %v469 = vld [vmem:[%s1 + $0x920] sm:$0xff]
  %v470 = vld [vmem:[%s1 + $0x928] sm:$0xff]
  %v471 = vld [vmem:[%s1 + $0x930] sm:$0xff]
  %v472 = vld [vmem:[%s1 + $0x938] sm:$0xff]
  %v473 = vld [vmem:[%s1 + $0x940] sm:$0xff]
  %v474 = vld [vmem:[%s1 + $0x948] sm:$0xff]
  %v475 = vld [vmem:[%s1 + $0x950] sm:$0xff]
  %v476 = vld [vmem:[%s1 + $0x958] sm:$0xff]
  %v477 = vld [vmem:[%s1 + $0x960] sm:$0xff]
  %v478 = vld [vmem:[%s1 + $0x968] sm:$0xff]
  %v479 = vld [vmem:[%s1 + $0x970] sm:$0xff]
  %v480 = vld [vmem:[%s1 + $0x978] sm:$0xff]
  %v481 = vld [vmem:[%s1 + $0x980] sm:$0xff]
  %v482 = vld [vmem:[%s1 + $0x988] sm:$0xff]
  %v483 = vld [vmem:[%s1 + $0x990] sm:$0xff]
  %v484 = vld [vmem:[%s1 + $0x998] sm:$0xff]
  %v485 = vld [vmem:[%s1 + $0x9a0] sm:$0xff]
  %v486 = vld [vmem:[%s1 + $0x9a8] sm:$0xff]
  %v487 = vld [vmem:[%s1 + $0x9b0] sm:$0xff]
  %v488 = vld [vmem:[%s1 + $0x9b8] sm:$0xff]
  %vm489 = vcmask 785408
  %v491 = vsel %vm489, %v26, 0
  %v494 = vsel %vm489, %v36, 0
  %v497 = vsel %vm489, %v46, 0
  %v500 = vsel %vm489, %v56, 0
  %v503 = vsel %vm489, %v66, 0
  %v506 = vsel %vm489, %v76, 0
  %v509 = vsel %vm489, %v86, 0
  %v512 = vsel %vm489, %v96, 0
  %v515 = vsel %vm489, %v106, 0
  %v518 = vsel %vm489, %v116, 0
  %v521 = vsel %vm489, %v126, 0
  %v524 = vsel %vm489, %v136, 0
  %v527 = vsel %vm489, %v146, 0
  %v530 = vsel %vm489, %v156, 0
  %v533 = vsel %vm489, %v166, 0
  %v536 = vsel %vm489, %v176, 0
  %538 = vmatpush.msra.mxu0 %v207
  %539 = vmatpush.msra.mxu0 %v205
  %540 = vmatpush.msra.mxu0 %v203
  %541 = vmatpush.msra.mxu0 %v201
  %542 = vmatpush.msra.mxu0 %v199
  %543 = vmatpush.msra.mxu0 %v197
  %544 = vmatpush.msra.mxu0 %v195
  %545 = vmatpush.msra.mxu0 %v193
  %546 = vmatpush.msra.mxu0 %v191
  %547 = vmatpush.msra.mxu0 %v189
  %548 = vmatpush.msra.mxu0 %v187
  %549 = vmatpush.msra.mxu0 %v185
  %550 = vmatpush.msra.mxu0 %v183
  %551 = vmatpush.msra.mxu0 %v181
  %552 = vmatpush.msra.mxu0 %v179
  %553 = vmatpush.msra.mxu0 %v177
  %554 = vmatmul.f32.gmra.mxu0 %v17
  %v555 = vpop.f32.mrf.mxu0
  %v556 = vadd.f32 0.0, %v555
  %557 = vmatmul.f32.gmra.mxu0 %v27
  %v558 = vpop.f32.mrf.mxu0
  %v559 = vadd.f32 0.0, %v558
  %560 = vmatmul.f32.gmra.mxu0 %v37
  %v561 = vpop.f32.mrf.mxu0
  %v562 = vadd.f32 0.0, %v561
  %563 = vmatmul.f32.gmra.mxu0 %v47
  %v564 = vpop.f32.mrf.mxu0
  %v565 = vadd.f32 0.0, %v564
  %566 = vmatmul.f32.gmra.mxu0 %v57
  %v567 = vpop.f32.mrf.mxu0
  %v568 = vadd.f32 0.0, %v567
  %569 = vmatmul.f32.gmra.mxu0 %v67
  %v570 = vpop.f32.mrf.mxu0
  %v571 = vadd.f32 0.0, %v570
  %572 = vmatmul.f32.gmra.mxu0 %v77
  %v573 = vpop.f32.mrf.mxu0
  %v574 = vadd.f32 0.0, %v573
  %575 = vmatmul.f32.gmra.mxu0 %v87
  %v576 = vpop.f32.mrf.mxu0
  %v577 = vadd.f32 0.0, %v576
  %578 = vmatmul.f32.gmra.mxu0 %v97
  %v579 = vpop.f32.mrf.mxu0
  %v580 = vadd.f32 0.0, %v579
  %581 = vmatmul.f32.gmra.mxu0 %v107
  %v582 = vpop.f32.mrf.mxu0
  %v583 = vadd.f32 0.0, %v582
  %584 = vmatmul.f32.gmra.mxu0 %v117
  %v585 = vpop.f32.mrf.mxu0
  %v586 = vadd.f32 0.0, %v585
  %587 = vmatmul.f32.gmra.mxu0 %v127
  %v588 = vpop.f32.mrf.mxu0
  %v589 = vadd.f32 0.0, %v588
  %590 = vmatmul.f32.gmra.mxu0 %v137
  %v591 = vpop.f32.mrf.mxu0
  %v592 = vadd.f32 0.0, %v591
  %593 = vmatmul.f32.gmra.mxu0 %v147
  %v594 = vpop.f32.mrf.mxu0
  %v595 = vadd.f32 0.0, %v594
  %596 = vmatmul.f32.gmra.mxu0 %v157
  %v597 = vpop.f32.mrf.mxu0
  %v598 = vadd.f32 0.0, %v597
  %599 = vmatmul.f32.gmra.mxu0 %v167
  %v600 = vpop.f32.mrf.mxu0
  %v601 = vadd.f32 0.0, %v600
  %602 = vdwg.mxu0
  %603 = vmatpush.msra.mxu0 %v239
  %604 = vmatpush.msra.mxu0 %v237
  %605 = vmatpush.msra.mxu0 %v235
  %606 = vmatpush.msra.mxu0 %v233
  %607 = vmatpush.msra.mxu0 %v231
  %608 = vmatpush.msra.mxu0 %v229
  %609 = vmatpush.msra.mxu0 %v227
  %610 = vmatpush.msra.mxu0 %v225
  %611 = vmatpush.msra.mxu0 %v223
  %612 = vmatpush.msra.mxu0 %v221
  %613 = vmatpush.msra.mxu0 %v219
  %614 = vmatpush.msra.mxu0 %v217
  %615 = vmatpush.msra.mxu0 %v215
  %616 = vmatpush.msra.mxu0 %v213
  %617 = vmatpush.msra.mxu0 %v211
  %618 = vmatpush.msra.mxu0 %v209
  %619 = vmatmul.f32.gmra.mxu0 %v18
  %v620 = vpop.f32.mrf.mxu0
  %v621 = vadd.f32 %v556, %v620
  %622 = vmatmul.f32.gmra.mxu0 %v28
  %v623 = vpop.f32.mrf.mxu0
  %v624 = vadd.f32 %v559, %v623
  %625 = vmatmul.f32.gmra.mxu0 %v38
  %v626 = vpop.f32.mrf.mxu0
  %v627 = vadd.f32 %v562, %v626
  %628 = vmatmul.f32.gmra.mxu0 %v48
  %v629 = vpop.f32.mrf.mxu0
  %v630 = vadd.f32 %v565, %v629
  %631 = vmatmul.f32.gmra.mxu0 %v58
  %v632 = vpop.f32.mrf.mxu0
  %v633 = vadd.f32 %v568, %v632
  %634 = vmatmul.f32.gmra.mxu0 %v68
  %v635 = vpop.f32.mrf.mxu0
  %v636 = vadd.f32 %v571, %v635
  %637 = vmatmul.f32.gmra.mxu0 %v78
  %v638 = vpop.f32.mrf.mxu0
  %v639 = vadd.f32 %v574, %v638
  %640 = vmatmul.f32.gmra.mxu0 %v88
  %v641 = vpop.f32.mrf.mxu0
  %v642 = vadd.f32 %v577, %v641
  %643 = vmatmul.f32.gmra.mxu0 %v98
  %v644 = vpop.f32.mrf.mxu0
  %v645 = vadd.f32 %v580, %v644
  %646 = vmatmul.f32.gmra.mxu0 %v108
  %v647 = vpop.f32.mrf.mxu0
  %v648 = vadd.f32 %v583, %v647
  %649 = vmatmul.f32.gmra.mxu0 %v118
  %v650 = vpop.f32.mrf.mxu0
  %v651 = vadd.f32 %v586, %v650
  %652 = vmatmul.f32.gmra.mxu0 %v128
  %v653 = vpop.f32.mrf.mxu0
  %v654 = vadd.f32 %v589, %v653
  %655 = vmatmul.f32.gmra.mxu0 %v138
  %v656 = vpop.f32.mrf.mxu0
  %v657 = vadd.f32 %v592, %v656
  %658 = vmatmul.f32.gmra.mxu0 %v148
  %v659 = vpop.f32.mrf.mxu0
  %v660 = vadd.f32 %v595, %v659
  %661 = vmatmul.f32.gmra.mxu0 %v158
  %v662 = vpop.f32.mrf.mxu0
  %v663 = vadd.f32 %v598, %v662
  %664 = vmatmul.f32.gmra.mxu0 %v168
  %v665 = vpop.f32.mrf.mxu0
  %v666 = vadd.f32 %v601, %v665
  %667 = vdwg.mxu0
  %668 = vmatpush.msra.mxu0 %v271
  %669 = vmatpush.msra.mxu0 %v269
  %670 = vmatpush.msra.mxu0 %v267
  %671 = vmatpush.msra.mxu0 %v265
  %672 = vmatpush.msra.mxu0 %v263
  %673 = vmatpush.msra.mxu0 %v261
  %674 = vmatpush.msra.mxu0 %v259
  %675 = vmatpush.msra.mxu0 %v257
  %676 = vmatpush.msra.mxu0 %v255
  %677 = vmatpush.msra.mxu0 %v253
  %678 = vmatpush.msra.mxu0 %v251
  %679 = vmatpush.msra.mxu0 %v249
  %680 = vmatpush.msra.mxu0 %v247
  %681 = vmatpush.msra.mxu0 %v245
  %682 = vmatpush.msra.mxu0 %v243
  %683 = vmatpush.msra.mxu0 %v241
  %684 = vmatmul.f32.gmra.mxu0 %v19
  %v685 = vpop.f32.mrf.mxu0
  %v686 = vadd.f32 %v621, %v685
  %687 = vmatmul.f32.gmra.mxu0 %v29
  %v688 = vpop.f32.mrf.mxu0
  %v689 = vadd.f32 %v624, %v688
  %690 = vmatmul.f32.gmra.mxu0 %v39
  %v691 = vpop.f32.mrf.mxu0
  %v692 = vadd.f32 %v627, %v691
  %693 = vmatmul.f32.gmra.mxu0 %v49
  %v694 = vpop.f32.mrf.mxu0
  %v695 = vadd.f32 %v630, %v694
  %696 = vmatmul.f32.gmra.mxu0 %v59
  %v697 = vpop.f32.mrf.mxu0
  %v698 = vadd.f32 %v633, %v697
  %699 = vmatmul.f32.gmra.mxu0 %v69
  %v700 = vpop.f32.mrf.mxu0
  %v701 = vadd.f32 %v636, %v700
  %702 = vmatmul.f32.gmra.mxu0 %v79
  %v703 = vpop.f32.mrf.mxu0
  %v704 = vadd.f32 %v639, %v703
  %705 = vmatmul.f32.gmra.mxu0 %v89
  %v706 = vpop.f32.mrf.mxu0
  %v707 = vadd.f32 %v642, %v706
  %708 = vmatmul.f32.gmra.mxu0 %v99
  %v709 = vpop.f32.mrf.mxu0
  %v710 = vadd.f32 %v645, %v709
  %711 = vmatmul.f32.gmra.mxu0 %v109
  %v712 = vpop.f32.mrf.mxu0
  %v713 = vadd.f32 %v648, %v712
  %714 = vmatmul.f32.gmra.mxu0 %v119
  %v715 = vpop.f32.mrf.mxu0
  %v716 = vadd.f32 %v651, %v715
  %717 = vmatmul.f32.gmra.mxu0 %v129
  %v718 = vpop.f32.mrf.mxu0
  %v719 = vadd.f32 %v654, %v718
  %720 = vmatmul.f32.gmra.mxu0 %v139
  %v721 = vpop.f32.mrf.mxu0
  %v722 = vadd.f32 %v657, %v721
  %723 = vmatmul.f32.gmra.mxu0 %v149
  %v724 = vpop.f32.mrf.mxu0
  %v725 = vadd.f32 %v660, %v724
  %726 = vmatmul.f32.gmra.mxu0 %v159
  %v727 = vpop.f32.mrf.mxu0
  %v728 = vadd.f32 %v663, %v727
  %729 = vmatmul.f32.gmra.mxu0 %v169
  %v730 = vpop.f32.mrf.mxu0
  %v731 = vadd.f32 %v666, %v730
  %732 = vdwg.mxu0
  %733 = vmatpush.msra.mxu0 %v303
  %734 = vmatpush.msra.mxu0 %v301
  %735 = vmatpush.msra.mxu0 %v299
  %736 = vmatpush.msra.mxu0 %v297
  %737 = vmatpush.msra.mxu0 %v295
  %738 = vmatpush.msra.mxu0 %v293
  %739 = vmatpush.msra.mxu0 %v291
  %740 = vmatpush.msra.mxu0 %v289
  %741 = vmatpush.msra.mxu0 %v287
  %742 = vmatpush.msra.mxu0 %v285
  %743 = vmatpush.msra.mxu0 %v283
  %744 = vmatpush.msra.mxu0 %v281
  %745 = vmatpush.msra.mxu0 %v279
  %746 = vmatpush.msra.mxu0 %v277
  %747 = vmatpush.msra.mxu0 %v275
  %748 = vmatpush.msra.mxu0 %v273
  %749 = vmatmul.f32.gmra.mxu0 %v20
  %v750 = vpop.f32.mrf.mxu0
  %v751 = vadd.f32 %v686, %v750
  %752 = vmatmul.f32.gmra.mxu0 %v30
  %v753 = vpop.f32.mrf.mxu0
  %v754 = vadd.f32 %v689, %v753
  %755 = vmatmul.f32.gmra.mxu0 %v40
  %v756 = vpop.f32.mrf.mxu0
  %v757 = vadd.f32 %v692, %v756
  %758 = vmatmul.f32.gmra.mxu0 %v50
  %v759 = vpop.f32.mrf.mxu0
  %v760 = vadd.f32 %v695, %v759
  %761 = vmatmul.f32.gmra.mxu0 %v60
  %v762 = vpop.f32.mrf.mxu0
  %v763 = vadd.f32 %v698, %v762
  %764 = vmatmul.f32.gmra.mxu0 %v70
  %v765 = vpop.f32.mrf.mxu0
  %v766 = vadd.f32 %v701, %v765
  %767 = vmatmul.f32.gmra.mxu0 %v80
  %v768 = vpop.f32.mrf.mxu0
  %v769 = vadd.f32 %v704, %v768
  %770 = vmatmul.f32.gmra.mxu0 %v90
  %v771 = vpop.f32.mrf.mxu0
  %v772 = vadd.f32 %v707, %v771
  %773 = vmatmul.f32.gmra.mxu0 %v100
  %v774 = vpop.f32.mrf.mxu0
  %v775 = vadd.f32 %v710, %v774
  %776 = vmatmul.f32.gmra.mxu0 %v110
  %v777 = vpop.f32.mrf.mxu0
  %v778 = vadd.f32 %v713, %v777
  %779 = vmatmul.f32.gmra.mxu0 %v120
  %v780 = vpop.f32.mrf.mxu0
  %v781 = vadd.f32 %v716, %v780
  %782 = vmatmul.f32.gmra.mxu0 %v130
  %v783 = vpop.f32.mrf.mxu0
  %v784 = vadd.f32 %v719, %v783
  %785 = vmatmul.f32.gmra.mxu0 %v140
  %v786 = vpop.f32.mrf.mxu0
  %v787 = vadd.f32 %v722, %v786
  %788 = vmatmul.f32.gmra.mxu0 %v150
  %v789 = vpop.f32.mrf.mxu0
  %v790 = vadd.f32 %v725, %v789
  %791 = vmatmul.f32.gmra.mxu0 %v160
  %v792 = vpop.f32.mrf.mxu0
  %v793 = vadd.f32 %v728, %v792
  %794 = vmatmul.f32.gmra.mxu0 %v170
  %v795 = vpop.f32.mrf.mxu0
  %v796 = vadd.f32 %v731, %v795
  %797 = vdwg.mxu0
  %798 = vmatpush.msra.mxu0 %v335
  %799 = vmatpush.msra.mxu0 %v333
  %800 = vmatpush.msra.mxu0 %v331
  %801 = vmatpush.msra.mxu0 %v329
  %802 = vmatpush.msra.mxu0 %v327
  %803 = vmatpush.msra.mxu0 %v325
  %804 = vmatpush.msra.mxu0 %v323
  %805 = vmatpush.msra.mxu0 %v321
  %806 = vmatpush.msra.mxu0 %v319
  %807 = vmatpush.msra.mxu0 %v317
  %808 = vmatpush.msra.mxu0 %v315
  %809 = vmatpush.msra.mxu0 %v313
  %810 = vmatpush.msra.mxu0 %v311
  %811 = vmatpush.msra.mxu0 %v309
  %812 = vmatpush.msra.mxu0 %v307
  %813 = vmatpush.msra.mxu0 %v305
  %814 = vmatmul.f32.gmra.mxu0 %v21
  %v815 = vpop.f32.mrf.mxu0
  %v816 = vadd.f32 %v751, %v815
  %817 = vmatmul.f32.gmra.mxu0 %v31
  %v818 = vpop.f32.mrf.mxu0
  %v819 = vadd.f32 %v754, %v818
  %820 = vmatmul.f32.gmra.mxu0 %v41
  %v821 = vpop.f32.mrf.mxu0
  %v822 = vadd.f32 %v757, %v821
  %823 = vmatmul.f32.gmra.mxu0 %v51
  %v824 = vpop.f32.mrf.mxu0
  %v825 = vadd.f32 %v760, %v824
  %826 = vmatmul.f32.gmra.mxu0 %v61
  %v827 = vpop.f32.mrf.mxu0
  %v828 = vadd.f32 %v763, %v827
  %829 = vmatmul.f32.gmra.mxu0 %v71
  %v830 = vpop.f32.mrf.mxu0
  %v831 = vadd.f32 %v766, %v830
  %832 = vmatmul.f32.gmra.mxu0 %v81
  %v833 = vpop.f32.mrf.mxu0
  %v834 = vadd.f32 %v769, %v833
  %835 = vmatmul.f32.gmra.mxu0 %v91
  %v836 = vpop.f32.mrf.mxu0
  %v837 = vadd.f32 %v772, %v836
  %838 = vmatmul.f32.gmra.mxu0 %v101
  %v839 = vpop.f32.mrf.mxu0
  %v840 = vadd.f32 %v775, %v839
  %841 = vmatmul.f32.gmra.mxu0 %v111
  %v842 = vpop.f32.mrf.mxu0
  %v843 = vadd.f32 %v778, %v842
  %844 = vmatmul.f32.gmra.mxu0 %v121
  %v845 = vpop.f32.mrf.mxu0
  %v846 = vadd.f32 %v781, %v845
  %847 = vmatmul.f32.gmra.mxu0 %v131
  %v848 = vpop.f32.mrf.mxu0
  %v849 = vadd.f32 %v784, %v848
  %850 = vmatmul.f32.gmra.mxu0 %v141
  %v851 = vpop.f32.mrf.mxu0
  %v852 = vadd.f32 %v787, %v851
  %853 = vmatmul.f32.gmra.mxu0 %v151
  %v854 = vpop.f32.mrf.mxu0
  %v855 = vadd.f32 %v790, %v854
  %856 = vmatmul.f32.gmra.mxu0 %v161
  %v857 = vpop.f32.mrf.mxu0
  %v858 = vadd.f32 %v793, %v857
  %859 = vmatmul.f32.gmra.mxu0 %v171
  %v860 = vpop.f32.mrf.mxu0
  %v861 = vadd.f32 %v796, %v860
  %862 = vdwg.mxu0
  %863 = vmatpush.msra.mxu0 %v367
  %864 = vmatpush.msra.mxu0 %v365
  %865 = vmatpush.msra.mxu0 %v363
  %866 = vmatpush.msra.mxu0 %v361
  %867 = vmatpush.msra.mxu0 %v359
  %868 = vmatpush.msra.mxu0 %v357
  %869 = vmatpush.msra.mxu0 %v355
  %870 = vmatpush.msra.mxu0 %v353
  %871 = vmatpush.msra.mxu0 %v351
  %872 = vmatpush.msra.mxu0 %v349
  %873 = vmatpush.msra.mxu0 %v347
  %874 = vmatpush.msra.mxu0 %v345
  %875 = vmatpush.msra.mxu0 %v343
  %876 = vmatpush.msra.mxu0 %v341
  %877 = vmatpush.msra.mxu0 %v339
  %878 = vmatpush.msra.mxu0 %v337
  %879 = vmatmul.f32.gmra.mxu0 %v22
  %v880 = vpop.f32.mrf.mxu0
  %v881 = vadd.f32 %v816, %v880
  %882 = vmatmul.f32.gmra.mxu0 %v32
  %v883 = vpop.f32.mrf.mxu0
  %v884 = vadd.f32 %v819, %v883
  %885 = vmatmul.f32.gmra.mxu0 %v42
  %v886 = vpop.f32.mrf.mxu0
  %v887 = vadd.f32 %v822, %v886
  %888 = vmatmul.f32.gmra.mxu0 %v52
  %v889 = vpop.f32.mrf.mxu0
  %v890 = vadd.f32 %v825, %v889
  %891 = vmatmul.f32.gmra.mxu0 %v62
  %v892 = vpop.f32.mrf.mxu0
  %v893 = vadd.f32 %v828, %v892
  %894 = vmatmul.f32.gmra.mxu0 %v72
  %v895 = vpop.f32.mrf.mxu0
  %v896 = vadd.f32 %v831, %v895
  %897 = vmatmul.f32.gmra.mxu0 %v82
  %v898 = vpop.f32.mrf.mxu0
  %v899 = vadd.f32 %v834, %v898
  %900 = vmatmul.f32.gmra.mxu0 %v92
  %v901 = vpop.f32.mrf.mxu0
  %v902 = vadd.f32 %v837, %v901
  %903 = vmatmul.f32.gmra.mxu0 %v102
  %v904 = vpop.f32.mrf.mxu0
  %v905 = vadd.f32 %v840, %v904
  %906 = vmatmul.f32.gmra.mxu0 %v112
  %v907 = vpop.f32.mrf.mxu0
  %v908 = vadd.f32 %v843, %v907
  %909 = vmatmul.f32.gmra.mxu0 %v122
  %v910 = vpop.f32.mrf.mxu0
  %v911 = vadd.f32 %v846, %v910
  %912 = vmatmul.f32.gmra.mxu0 %v132
  %v913 = vpop.f32.mrf.mxu0
  %v914 = vadd.f32 %v849, %v913
  %915 = vmatmul.f32.gmra.mxu0 %v142
  %v916 = vpop.f32.mrf.mxu0
  %v917 = vadd.f32 %v852, %v916
  %918 = vmatmul.f32.gmra.mxu0 %v152
  %v919 = vpop.f32.mrf.mxu0
  %v920 = vadd.f32 %v855, %v919
  %921 = vmatmul.f32.gmra.mxu0 %v162
  %v922 = vpop.f32.mrf.mxu0
  %v923 = vadd.f32 %v858, %v922
  %924 = vmatmul.f32.gmra.mxu0 %v172
  %v925 = vpop.f32.mrf.mxu0
  %v926 = vadd.f32 %v861, %v925
  %927 = vdwg.mxu0
  %928 = vmatpush.msra.mxu0 %v399
  %929 = vmatpush.msra.mxu0 %v397
  %930 = vmatpush.msra.mxu0 %v395
  %931 = vmatpush.msra.mxu0 %v393
  %932 = vmatpush.msra.mxu0 %v391
  %933 = vmatpush.msra.mxu0 %v389
  %934 = vmatpush.msra.mxu0 %v387
  %935 = vmatpush.msra.mxu0 %v385
  %936 = vmatpush.msra.mxu0 %v383
  %937 = vmatpush.msra.mxu0 %v381
  %938 = vmatpush.msra.mxu0 %v379
  %939 = vmatpush.msra.mxu0 %v377
  %940 = vmatpush.msra.mxu0 %v375
  %941 = vmatpush.msra.mxu0 %v373
  %942 = vmatpush.msra.mxu0 %v371
  %943 = vmatpush.msra.mxu0 %v369
  %944 = vmatmul.f32.gmra.mxu0 %v23
  %v945 = vpop.f32.mrf.mxu0
  %v946 = vadd.f32 %v881, %v945
  %947 = vmatmul.f32.gmra.mxu0 %v33
  %v948 = vpop.f32.mrf.mxu0
  %v949 = vadd.f32 %v884, %v948
  %950 = vmatmul.f32.gmra.mxu0 %v43
  %v951 = vpop.f32.mrf.mxu0
  %v952 = vadd.f32 %v887, %v951
  %953 = vmatmul.f32.gmra.mxu0 %v53
  %v954 = vpop.f32.mrf.mxu0
  %v955 = vadd.f32 %v890, %v954
  %956 = vmatmul.f32.gmra.mxu0 %v63
  %v957 = vpop.f32.mrf.mxu0
  %v958 = vadd.f32 %v893, %v957
  %959 = vmatmul.f32.gmra.mxu0 %v73
  %v960 = vpop.f32.mrf.mxu0
  %v961 = vadd.f32 %v896, %v960
  %962 = vmatmul.f32.gmra.mxu0 %v83
  %v963 = vpop.f32.mrf.mxu0
  %v964 = vadd.f32 %v899, %v963
  %965 = vmatmul.f32.gmra.mxu0 %v93
  %v966 = vpop.f32.mrf.mxu0
  %v967 = vadd.f32 %v902, %v966
  %968 = vmatmul.f32.gmra.mxu0 %v103
  %v969 = vpop.f32.mrf.mxu0
  %v970 = vadd.f32 %v905, %v969
  %971 = vmatmul.f32.gmra.mxu0 %v113
  %v972 = vpop.f32.mrf.mxu0
  %v973 = vadd.f32 %v908, %v972
  %974 = vmatmul.f32.gmra.mxu0 %v123
  %v975 = vpop.f32.mrf.mxu0
  %v976 = vadd.f32 %v911, %v975
  %977 = vmatmul.f32.gmra.mxu0 %v133
  %v978 = vpop.f32.mrf.mxu0
  %v979 = vadd.f32 %v914, %v978
  %980 = vmatmul.f32.gmra.mxu0 %v143
  %v981 = vpop.f32.mrf.mxu0
  %v982 = vadd.f32 %v917, %v981
  %983 = vmatmul.f32.gmra.mxu0 %v153
  %v984 = vpop.f32.mrf.mxu0
  %v985 = vadd.f32 %v920, %v984
  %986 = vmatmul.f32.gmra.mxu0 %v163
  %v987 = vpop.f32.mrf.mxu0
  %v988 = vadd.f32 %v923, %v987
  %989 = vmatmul.f32.gmra.mxu0 %v173
  %v990 = vpop.f32.mrf.mxu0
  %v991 = vadd.f32 %v926, %v990
  %992 = vdwg.mxu0
  %993 = vmatpush.msra.mxu0 %v431
  %994 = vmatpush.msra.mxu0 %v429
  %995 = vmatpush.msra.mxu0 %v427
  %996 = vmatpush.msra.mxu0 %v425
  %997 = vmatpush.msra.mxu0 %v423
  %998 = vmatpush.msra.mxu0 %v421
  %999 = vmatpush.msra.mxu0 %v419
  %1000 = vmatpush.msra.mxu0 %v417
  %1001 = vmatpush.msra.mxu0 %v415
  %1002 = vmatpush.msra.mxu0 %v413
  %1003 = vmatpush.msra.mxu0 %v411
  %1004 = vmatpush.msra.mxu0 %v409
  %1005 = vmatpush.msra.mxu0 %v407
  %1006 = vmatpush.msra.mxu0 %v405
  %1007 = vmatpush.msra.mxu0 %v403
  %1008 = vmatpush.msra.mxu0 %v401
  %1009 = vmatmul.f32.gmra.mxu0 %v24
  %v1010 = vpop.f32.mrf.mxu0
  %v1011 = vadd.f32 %v946, %v1010
  %1012 = vmatmul.f32.gmra.mxu0 %v34
  %v1013 = vpop.f32.mrf.mxu0
  %v1014 = vadd.f32 %v949, %v1013
  %1015 = vmatmul.f32.gmra.mxu0 %v44
  %v1016 = vpop.f32.mrf.mxu0
  %v1017 = vadd.f32 %v952, %v1016
  %1018 = vmatmul.f32.gmra.mxu0 %v54
  %v1019 = vpop.f32.mrf.mxu0
  %v1020 = vadd.f32 %v955, %v1019
  %1021 = vmatmul.f32.gmra.mxu0 %v64
  %v1022 = vpop.f32.mrf.mxu0
  %v1023 = vadd.f32 %v958, %v1022
  %1024 = vmatmul.f32.gmra.mxu0 %v74
  %v1025 = vpop.f32.mrf.mxu0
  %v1026 = vadd.f32 %v961, %v1025
  %1027 = vmatmul.f32.gmra.mxu0 %v84
  %v1028 = vpop.f32.mrf.mxu0
  %v1029 = vadd.f32 %v964, %v1028
  %1030 = vmatmul.f32.gmra.mxu0 %v94
  %v1031 = vpop.f32.mrf.mxu0
  %v1032 = vadd.f32 %v967, %v1031
  %1033 = vmatmul.f32.gmra.mxu0 %v104
  %v1034 = vpop.f32.mrf.mxu0
  %v1035 = vadd.f32 %v970, %v1034
  %1036 = vmatmul.f32.gmra.mxu0 %v114
  %v1037 = vpop.f32.mrf.mxu0
  %v1038 = vadd.f32 %v973, %v1037
  %1039 = vmatmul.f32.gmra.mxu0 %v124
  %v1040 = vpop.f32.mrf.mxu0
  %v1041 = vadd.f32 %v976, %v1040
  %1042 = vmatmul.f32.gmra.mxu0 %v134
  %v1043 = vpop.f32.mrf.mxu0
  %v1044 = vadd.f32 %v979, %v1043
  %1045 = vmatmul.f32.gmra.mxu0 %v144
  %v1046 = vpop.f32.mrf.mxu0
  %v1047 = vadd.f32 %v982, %v1046
  %1048 = vmatmul.f32.gmra.mxu0 %v154
  %v1049 = vpop.f32.mrf.mxu0
  %v1050 = vadd.f32 %v985, %v1049
  %1051 = vmatmul.f32.gmra.mxu0 %v164
  %v1052 = vpop.f32.mrf.mxu0
  %v1053 = vadd.f32 %v988, %v1052
  %1054 = vmatmul.f32.gmra.mxu0 %v174
  %v1055 = vpop.f32.mrf.mxu0
  %v1056 = vadd.f32 %v991, %v1055
  %1057 = vdwg.mxu0
  %1058 = vmatpush.msra.mxu0 %v463
  %1059 = vmatpush.msra.mxu0 %v461
  %1060 = vmatpush.msra.mxu0 %v459
  %1061 = vmatpush.msra.mxu0 %v457
  %1062 = vmatpush.msra.mxu0 %v455
  %1063 = vmatpush.msra.mxu0 %v453
  %1064 = vmatpush.msra.mxu0 %v451
  %1065 = vmatpush.msra.mxu0 %v449
  %1066 = vmatpush.msra.mxu0 %v447
  %1067 = vmatpush.msra.mxu0 %v445
  %1068 = vmatpush.msra.mxu0 %v443
  %1069 = vmatpush.msra.mxu0 %v441
  %1070 = vmatpush.msra.mxu0 %v439
  %1071 = vmatpush.msra.mxu0 %v437
  %1072 = vmatpush.msra.mxu0 %v435
  %1073 = vmatpush.msra.mxu0 %v433
  %1074 = vmatmul.f32.gmra.mxu0 %v25
  %v1075 = vpop.f32.mrf.mxu0
  %v1076 = vadd.f32 %v1011, %v1075
  %1077 = vmatmul.f32.gmra.mxu0 %v35
  %v1078 = vpop.f32.mrf.mxu0
  %v1079 = vadd.f32 %v1014, %v1078
  %1080 = vmatmul.f32.gmra.mxu0 %v45
  %v1081 = vpop.f32.mrf.mxu0
  %v1082 = vadd.f32 %v1017, %v1081
  %1083 = vmatmul.f32.gmra.mxu0 %v55
  %v1084 = vpop.f32.mrf.mxu0
  %v1085 = vadd.f32 %v1020, %v1084
  %1086 = vmatmul.f32.gmra.mxu0 %v65
  %v1087 = vpop.f32.mrf.mxu0
  %v1088 = vadd.f32 %v1023, %v1087
  %1089 = vmatmul.f32.gmra.mxu0 %v75
  %v1090 = vpop.f32.mrf.mxu0
  %v1091 = vadd.f32 %v1026, %v1090
  %1092 = vmatmul.f32.gmra.mxu0 %v85
  %v1093 = vpop.f32.mrf.mxu0
  %v1094 = vadd.f32 %v1029, %v1093
  %1095 = vmatmul.f32.gmra.mxu0 %v95
  %v1096 = vpop.f32.mrf.mxu0
  %v1097 = vadd.f32 %v1032, %v1096
  %1098 = vmatmul.f32.gmra.mxu0 %v105
  %v1099 = vpop.f32.mrf.mxu0
  %v1100 = vadd.f32 %v1035, %v1099
  %1101 = vmatmul.f32.gmra.mxu0 %v115
  %v1102 = vpop.f32.mrf.mxu0
  %v1103 = vadd.f32 %v1038, %v1102
  %1104 = vmatmul.f32.gmra.mxu0 %v125
  %v1105 = vpop.f32.mrf.mxu0
  %v1106 = vadd.f32 %v1041, %v1105
  %1107 = vmatmul.f32.gmra.mxu0 %v135
  %v1108 = vpop.f32.mrf.mxu0
  %v1109 = vadd.f32 %v1044, %v1108
  %1110 = vmatmul.f32.gmra.mxu0 %v145
  %v1111 = vpop.f32.mrf.mxu0
  %v1112 = vadd.f32 %v1047, %v1111
  %1113 = vmatmul.f32.gmra.mxu0 %v155
  %v1114 = vpop.f32.mrf.mxu0
  %v1115 = vadd.f32 %v1050, %v1114
  %1116 = vmatmul.f32.gmra.mxu0 %v165
  %v1117 = vpop.f32.mrf.mxu0
  %v1118 = vadd.f32 %v1053, %v1117
  %1119 = vmatmul.f32.gmra.mxu0 %v175
  %v1120 = vpop.f32.mrf.mxu0
  %v1121 = vadd.f32 %v1056, %v1120
  %1122 = vdwg.mxu0
  %1123 = vmatpush.msra.mxu0 0.0
  %1124 = vmatpush.msra.mxu0 0.0
  %1125 = vmatpush.msra.mxu0 0.0
  %1126 = vmatpush.msra.mxu0 0.0
  %1127 = vmatpush.msra.mxu0 %v487
  %1128 = vmatpush.msra.mxu0 %v485
  %1129 = vmatpush.msra.mxu0 %v483
  %1130 = vmatpush.msra.mxu0 %v481
  %1131 = vmatpush.msra.mxu0 %v479
  %1132 = vmatpush.msra.mxu0 %v477
  %1133 = vmatpush.msra.mxu0 %v475
  %1134 = vmatpush.msra.mxu0 %v473
  %1135 = vmatpush.msra.mxu0 %v471
  %1136 = vmatpush.msra.mxu0 %v469
  %1137 = vmatpush.msra.mxu0 %v467
  %1138 = vmatpush.msra.mxu0 %v465
  %1139 = vmatmul.f32.gmra.mxu0 %v491
  %v1140 = vpop.f32.mrf.mxu0
  %v1141 = vadd.f32 %v1076, %v1140
  %1142 = vmatmul.f32.gmra.mxu0 %v494
  %v1143 = vpop.f32.mrf.mxu0
  %v1144 = vadd.f32 %v1079, %v1143
  %1145 = vmatmul.f32.gmra.mxu0 %v497
  %v1146 = vpop.f32.mrf.mxu0
  %v1147 = vadd.f32 %v1082, %v1146
  %1148 = vmatmul.f32.gmra.mxu0 %v500
  %v1149 = vpop.f32.mrf.mxu0
  %v1150 = vadd.f32 %v1085, %v1149
  %1151 = vmatmul.f32.gmra.mxu0 %v503
  %v1152 = vpop.f32.mrf.mxu0
  %v1153 = vadd.f32 %v1088, %v1152
  %1154 = vmatmul.f32.gmra.mxu0 %v506
  %v1155 = vpop.f32.mrf.mxu0
  %v1156 = vadd.f32 %v1091, %v1155
  %1157 = vmatmul.f32.gmra.mxu0 %v509
  %v1158 = vpop.f32.mrf.mxu0
  %v1159 = vadd.f32 %v1094, %v1158
  %1160 = vmatmul.f32.gmra.mxu0 %v512
  %v1161 = vpop.f32.mrf.mxu0
  %v1162 = vadd.f32 %v1097, %v1161
  %1163 = vmatmul.f32.gmra.mxu0 %v515
  %v1164 = vpop.f32.mrf.mxu0
  %v1165 = vadd.f32 %v1100, %v1164
  %1166 = vmatmul.f32.gmra.mxu0 %v518
  %v1167 = vpop.f32.mrf.mxu0
  %v1168 = vadd.f32 %v1103, %v1167
  %1169 = vmatmul.f32.gmra.mxu0 %v521
  %v1170 = vpop.f32.mrf.mxu0
  %v1171 = vadd.f32 %v1106, %v1170
  %1172 = vmatmul.f32.gmra.mxu0 %v524
  %v1173 = vpop.f32.mrf.mxu0
  %v1174 = vadd.f32 %v1109, %v1173
  %1175 = vmatmul.f32.gmra.mxu0 %v527
  %v1176 = vpop.f32.mrf.mxu0
  %v1177 = vadd.f32 %v1112, %v1176
  %1178 = vmatmul.f32.gmra.mxu0 %v530
  %v1179 = vpop.f32.mrf.mxu0
  %v1180 = vadd.f32 %v1115, %v1179
  %1181 = vmatmul.f32.gmra.mxu0 %v533
  %v1182 = vpop.f32.mrf.mxu0
  %v1183 = vadd.f32 %v1118, %v1182
  %1184 = vmatmul.f32.gmra.mxu0 %v536
  %v1185 = vpop.f32.mrf.mxu0
  %v1186 = vadd.f32 %v1121, %v1185
  %1187 = vdwg.mxu0
  %1188 = vmatpush.msra.mxu0 %v208
  %1189 = vmatpush.msra.mxu0 %v206
  %1190 = vmatpush.msra.mxu0 %v204
  %1191 = vmatpush.msra.mxu0 %v202
  %1192 = vmatpush.msra.mxu0 %v200
  %1193 = vmatpush.msra.mxu0 %v198
  %1194 = vmatpush.msra.mxu0 %v196
  %1195 = vmatpush.msra.mxu0 %v194
  %1196 = vmatpush.msra.mxu0 %v192
  %1197 = vmatpush.msra.mxu0 %v190
  %1198 = vmatpush.msra.mxu0 %v188
  %1199 = vmatpush.msra.mxu0 %v186
  %1200 = vmatpush.msra.mxu0 %v184
  %1201 = vmatpush.msra.mxu0 %v182
  %1202 = vmatpush.msra.mxu0 %v180
  %1203 = vmatpush.msra.mxu0 %v178
  %1204 = vmatmul.f32.gmra.mxu0 %v17
  %v1205 = vpop.f32.mrf.mxu0
  %v1206 = vadd.f32 0.0, %v1205
  %1207 = vmatmul.f32.gmra.mxu0 %v27
  %v1208 = vpop.f32.mrf.mxu0
  %v1209 = vadd.f32 0.0, %v1208
  %1210 = vmatmul.f32.gmra.mxu0 %v37
  %v1211 = vpop.f32.mrf.mxu0
  %v1212 = vadd.f32 0.0, %v1211
  %1213 = vmatmul.f32.gmra.mxu0 %v47
  %v1214 = vpop.f32.mrf.mxu0
  %v1215 = vadd.f32 0.0, %v1214
  %1216 = vmatmul.f32.gmra.mxu0 %v57
  %v1217 = vpop.f32.mrf.mxu0
  %v1218 = vadd.f32 0.0, %v1217
  %1219 = vmatmul.f32.gmra.mxu0 %v67
  %v1220 = vpop.f32.mrf.mxu0
  %v1221 = vadd.f32 0.0, %v1220
  %1222 = vmatmul.f32.gmra.mxu0 %v77
  %v1223 = vpop.f32.mrf.mxu0
  %v1224 = vadd.f32 0.0, %v1223
  %1225 = vmatmul.f32.gmra.mxu0 %v87
  %v1226 = vpop.f32.mrf.mxu0
  %v1227 = vadd.f32 0.0, %v1226
  %1228 = vmatmul.f32.gmra.mxu0 %v97
  %v1229 = vpop.f32.mrf.mxu0
  %v1230 = vadd.f32 0.0, %v1229
  %1231 = vmatmul.f32.gmra.mxu0 %v107
  %v1232 = vpop.f32.mrf.mxu0
  %v1233 = vadd.f32 0.0, %v1232
  %1234 = vmatmul.f32.gmra.mxu0 %v117
  %v1235 = vpop.f32.mrf.mxu0
  %v1236 = vadd.f32 0.0, %v1235
  %1237 = vmatmul.f32.gmra.mxu0 %v127
  %v1238 = vpop.f32.mrf.mxu0
  %v1239 = vadd.f32 0.0, %v1238
  %1240 = vmatmul.f32.gmra.mxu0 %v137
  %v1241 = vpop.f32.mrf.mxu0
  %v1242 = vadd.f32 0.0, %v1241
  %1243 = vmatmul.f32.gmra.mxu0 %v147
  %v1244 = vpop.f32.mrf.mxu0
  %v1245 = vadd.f32 0.0, %v1244
  %1246 = vmatmul.f32.gmra.mxu0 %v157
  %v1247 = vpop.f32.mrf.mxu0
  %v1248 = vadd.f32 0.0, %v1247
  %1249 = vmatmul.f32.gmra.mxu0 %v167
  %v1250 = vpop.f32.mrf.mxu0
  %v1251 = vadd.f32 0.0, %v1250
  %1252 = vdwg.mxu0
  %1253 = vmatpush.msra.mxu0 %v240
  %1254 = vmatpush.msra.mxu0 %v238
  %1255 = vmatpush.msra.mxu0 %v236
  %1256 = vmatpush.msra.mxu0 %v234
  %1257 = vmatpush.msra.mxu0 %v232
  %1258 = vmatpush.msra.mxu0 %v230
  %1259 = vmatpush.msra.mxu0 %v228
  %1260 = vmatpush.msra.mxu0 %v226
  %1261 = vmatpush.msra.mxu0 %v224
  %1262 = vmatpush.msra.mxu0 %v222
  %1263 = vmatpush.msra.mxu0 %v220
  %1264 = vmatpush.msra.mxu0 %v218
  %1265 = vmatpush.msra.mxu0 %v216
  %1266 = vmatpush.msra.mxu0 %v214
  %1267 = vmatpush.msra.mxu0 %v212
  %1268 = vmatpush.msra.mxu0 %v210
  %1269 = vmatmul.f32.gmra.mxu0 %v18
  %v1270 = vpop.f32.mrf.mxu0
  %v1271 = vadd.f32 %v1206, %v1270
  %1272 = vmatmul.f32.gmra.mxu0 %v28
  %v1273 = vpop.f32.mrf.mxu0
  %v1274 = vadd.f32 %v1209, %v1273
  %1275 = vmatmul.f32.gmra.mxu0 %v38
  %v1276 = vpop.f32.mrf.mxu0
  %v1277 = vadd.f32 %v1212, %v1276
  %1278 = vmatmul.f32.gmra.mxu0 %v48
  %v1279 = vpop.f32.mrf.mxu0
  %v1280 = vadd.f32 %v1215, %v1279
  %1281 = vmatmul.f32.gmra.mxu0 %v58
  %v1282 = vpop.f32.mrf.mxu0
  %v1283 = vadd.f32 %v1218, %v1282
  %1284 = vmatmul.f32.gmra.mxu0 %v68
  %v1285 = vpop.f32.mrf.mxu0
  %v1286 = vadd.f32 %v1221, %v1285
  %1287 = vmatmul.f32.gmra.mxu0 %v78
  %v1288 = vpop.f32.mrf.mxu0
  %v1289 = vadd.f32 %v1224, %v1288
  %1290 = vmatmul.f32.gmra.mxu0 %v88
  %v1291 = vpop.f32.mrf.mxu0
  %v1292 = vadd.f32 %v1227, %v1291
  %1293 = vmatmul.f32.gmra.mxu0 %v98
  %v1294 = vpop.f32.mrf.mxu0
  %v1295 = vadd.f32 %v1230, %v1294
  %1296 = vmatmul.f32.gmra.mxu0 %v108
  %v1297 = vpop.f32.mrf.mxu0
  %v1298 = vadd.f32 %v1233, %v1297
  %1299 = vmatmul.f32.gmra.mxu0 %v118
  %v1300 = vpop.f32.mrf.mxu0
  %v1301 = vadd.f32 %v1236, %v1300
  %1302 = vmatmul.f32.gmra.mxu0 %v128
  %v1303 = vpop.f32.mrf.mxu0
  %v1304 = vadd.f32 %v1239, %v1303
  %1305 = vmatmul.f32.gmra.mxu0 %v138
  %v1306 = vpop.f32.mrf.mxu0
  %v1307 = vadd.f32 %v1242, %v1306
  %1308 = vmatmul.f32.gmra.mxu0 %v148
  %v1309 = vpop.f32.mrf.mxu0
  %v1310 = vadd.f32 %v1245, %v1309
  %1311 = vmatmul.f32.gmra.mxu0 %v158
  %v1312 = vpop.f32.mrf.mxu0
  %v1313 = vadd.f32 %v1248, %v1312
  %1314 = vmatmul.f32.gmra.mxu0 %v168
  %v1315 = vpop.f32.mrf.mxu0
  %v1316 = vadd.f32 %v1251, %v1315
  %1317 = vdwg.mxu0
  %1318 = vmatpush.msra.mxu0 %v272
  %1319 = vmatpush.msra.mxu0 %v270
  %1320 = vmatpush.msra.mxu0 %v268
  %1321 = vmatpush.msra.mxu0 %v266
  %1322 = vmatpush.msra.mxu0 %v264
  %1323 = vmatpush.msra.mxu0 %v262
  %1324 = vmatpush.msra.mxu0 %v260
  %1325 = vmatpush.msra.mxu0 %v258
  %1326 = vmatpush.msra.mxu0 %v256
  %1327 = vmatpush.msra.mxu0 %v254
  %1328 = vmatpush.msra.mxu0 %v252
  %1329 = vmatpush.msra.mxu0 %v250
  %1330 = vmatpush.msra.mxu0 %v248
  %1331 = vmatpush.msra.mxu0 %v246
  %1332 = vmatpush.msra.mxu0 %v244
  %1333 = vmatpush.msra.mxu0 %v242
  %1334 = vmatmul.f32.gmra.mxu0 %v19
  %v1335 = vpop.f32.mrf.mxu0
  %v1336 = vadd.f32 %v1271, %v1335
  %1337 = vmatmul.f32.gmra.mxu0 %v29
  %v1338 = vpop.f32.mrf.mxu0
  %v1339 = vadd.f32 %v1274, %v1338
  %1340 = vmatmul.f32.gmra.mxu0 %v39
  %v1341 = vpop.f32.mrf.mxu0
  %v1342 = vadd.f32 %v1277, %v1341
  %1343 = vmatmul.f32.gmra.mxu0 %v49
  %v1344 = vpop.f32.mrf.mxu0
  %v1345 = vadd.f32 %v1280, %v1344
  %1346 = vmatmul.f32.gmra.mxu0 %v59
  %v1347 = vpop.f32.mrf.mxu0
  %v1348 = vadd.f32 %v1283, %v1347
  %1349 = vmatmul.f32.gmra.mxu0 %v69
  %v1350 = vpop.f32.mrf.mxu0
  %v1351 = vadd.f32 %v1286, %v1350
  %1352 = vmatmul.f32.gmra.mxu0 %v79
  %v1353 = vpop.f32.mrf.mxu0
  %v1354 = vadd.f32 %v1289, %v1353
  %1355 = vmatmul.f32.gmra.mxu0 %v89
  %v1356 = vpop.f32.mrf.mxu0
  %v1357 = vadd.f32 %v1292, %v1356
  %1358 = vmatmul.f32.gmra.mxu0 %v99
  %v1359 = vpop.f32.mrf.mxu0
  %v1360 = vadd.f32 %v1295, %v1359
  %1361 = vmatmul.f32.gmra.mxu0 %v109
  %v1362 = vpop.f32.mrf.mxu0
  %v1363 = vadd.f32 %v1298, %v1362
  %1364 = vmatmul.f32.gmra.mxu0 %v119
  %v1365 = vpop.f32.mrf.mxu0
  %v1366 = vadd.f32 %v1301, %v1365
  %1367 = vmatmul.f32.gmra.mxu0 %v129
  %v1368 = vpop.f32.mrf.mxu0
  %v1369 = vadd.f32 %v1304, %v1368
  %1370 = vmatmul.f32.gmra.mxu0 %v139
  %v1371 = vpop.f32.mrf.mxu0
  %v1372 = vadd.f32 %v1307, %v1371
  %1373 = vmatmul.f32.gmra.mxu0 %v149
  %v1374 = vpop.f32.mrf.mxu0
  %v1375 = vadd.f32 %v1310, %v1374
  %1376 = vmatmul.f32.gmra.mxu0 %v159
  %v1377 = vpop.f32.mrf.mxu0
  %v1378 = vadd.f32 %v1313, %v1377
  %1379 = vmatmul.f32.gmra.mxu0 %v169
  %v1380 = vpop.f32.mrf.mxu0
  %v1381 = vadd.f32 %v1316, %v1380
  %1382 = vdwg.mxu0
  %1383 = vmatpush.msra.mxu0 %v304
  %1384 = vmatpush.msra.mxu0 %v302
  %1385 = vmatpush.msra.mxu0 %v300
  %1386 = vmatpush.msra.mxu0 %v298
  %1387 = vmatpush.msra.mxu0 %v296
  %1388 = vmatpush.msra.mxu0 %v294
  %1389 = vmatpush.msra.mxu0 %v292
  %1390 = vmatpush.msra.mxu0 %v290
  %1391 = vmatpush.msra.mxu0 %v288
  %1392 = vmatpush.msra.mxu0 %v286
  %1393 = vmatpush.msra.mxu0 %v284
  %1394 = vmatpush.msra.mxu0 %v282
  %1395 = vmatpush.msra.mxu0 %v280
  %1396 = vmatpush.msra.mxu0 %v278
  %1397 = vmatpush.msra.mxu0 %v276
  %1398 = vmatpush.msra.mxu0 %v274
  %1399 = vmatmul.f32.gmra.mxu0 %v20
  %v1400 = vpop.f32.mrf.mxu0
  %v1401 = vadd.f32 %v1336, %v1400
  %1402 = vmatmul.f32.gmra.mxu0 %v30
  %v1403 = vpop.f32.mrf.mxu0
  %v1404 = vadd.f32 %v1339, %v1403
  %1405 = vmatmul.f32.gmra.mxu0 %v40
  %v1406 = vpop.f32.mrf.mxu0
  %v1407 = vadd.f32 %v1342, %v1406
  %1408 = vmatmul.f32.gmra.mxu0 %v50
  %v1409 = vpop.f32.mrf.mxu0
  %v1410 = vadd.f32 %v1345, %v1409
  %1411 = vmatmul.f32.gmra.mxu0 %v60
  %v1412 = vpop.f32.mrf.mxu0
  %v1413 = vadd.f32 %v1348, %v1412
  %1414 = vmatmul.f32.gmra.mxu0 %v70
  %v1415 = vpop.f32.mrf.mxu0
  %v1416 = vadd.f32 %v1351, %v1415
  %1417 = vmatmul.f32.gmra.mxu0 %v80
  %v1418 = vpop.f32.mrf.mxu0
  %v1419 = vadd.f32 %v1354, %v1418
  %1420 = vmatmul.f32.gmra.mxu0 %v90
  %v1421 = vpop.f32.mrf.mxu0
  %v1422 = vadd.f32 %v1357, %v1421
  %1423 = vmatmul.f32.gmra.mxu0 %v100
  %v1424 = vpop.f32.mrf.mxu0
  %v1425 = vadd.f32 %v1360, %v1424
  %1426 = vmatmul.f32.gmra.mxu0 %v110
  %v1427 = vpop.f32.mrf.mxu0
  %v1428 = vadd.f32 %v1363, %v1427
  %1429 = vmatmul.f32.gmra.mxu0 %v120
  %v1430 = vpop.f32.mrf.mxu0
  %v1431 = vadd.f32 %v1366, %v1430
  %1432 = vmatmul.f32.gmra.mxu0 %v130
  %v1433 = vpop.f32.mrf.mxu0
  %v1434 = vadd.f32 %v1369, %v1433
  %1435 = vmatmul.f32.gmra.mxu0 %v140
  %v1436 = vpop.f32.mrf.mxu0
  %v1437 = vadd.f32 %v1372, %v1436
  %1438 = vmatmul.f32.gmra.mxu0 %v150
  %v1439 = vpop.f32.mrf.mxu0
  %v1440 = vadd.f32 %v1375, %v1439
  %1441 = vmatmul.f32.gmra.mxu0 %v160
  %v1442 = vpop.f32.mrf.mxu0
  %v1443 = vadd.f32 %v1378, %v1442
  %1444 = vmatmul.f32.gmra.mxu0 %v170
  %v1445 = vpop.f32.mrf.mxu0
  %v1446 = vadd.f32 %v1381, %v1445
  %1447 = vdwg.mxu0
  %1448 = vmatpush.msra.mxu0 %v336
  %1449 = vmatpush.msra.mxu0 %v334
  %1450 = vmatpush.msra.mxu0 %v332
  %1451 = vmatpush.msra.mxu0 %v330
  %1452 = vmatpush.msra.mxu0 %v328
  %1453 = vmatpush.msra.mxu0 %v326
  %1454 = vmatpush.msra.mxu0 %v324
  %1455 = vmatpush.msra.mxu0 %v322
  %1456 = vmatpush.msra.mxu0 %v320
  %1457 = vmatpush.msra.mxu0 %v318
  %1458 = vmatpush.msra.mxu0 %v316
  %1459 = vmatpush.msra.mxu0 %v314
  %1460 = vmatpush.msra.mxu0 %v312
  %1461 = vmatpush.msra.mxu0 %v310
  %1462 = vmatpush.msra.mxu0 %v308
  %1463 = vmatpush.msra.mxu0 %v306
  %1464 = vmatmul.f32.gmra.mxu0 %v21
  %v1465 = vpop.f32.mrf.mxu0
  %v1466 = vadd.f32 %v1401, %v1465
  %1467 = vmatmul.f32.gmra.mxu0 %v31
  %v1468 = vpop.f32.mrf.mxu0
  %v1469 = vadd.f32 %v1404, %v1468
  %1470 = vmatmul.f32.gmra.mxu0 %v41
  %v1471 = vpop.f32.mrf.mxu0
  %v1472 = vadd.f32 %v1407, %v1471
  %1473 = vmatmul.f32.gmra.mxu0 %v51
  %v1474 = vpop.f32.mrf.mxu0
  %v1475 = vadd.f32 %v1410, %v1474
  %1476 = vmatmul.f32.gmra.mxu0 %v61
  %v1477 = vpop.f32.mrf.mxu0
  %v1478 = vadd.f32 %v1413, %v1477
  %1479 = vmatmul.f32.gmra.mxu0 %v71
  %v1480 = vpop.f32.mrf.mxu0
  %v1481 = vadd.f32 %v1416, %v1480
  %1482 = vmatmul.f32.gmra.mxu0 %v81
  %v1483 = vpop.f32.mrf.mxu0
  %v1484 = vadd.f32 %v1419, %v1483
  %1485 = vmatmul.f32.gmra.mxu0 %v91
  %v1486 = vpop.f32.mrf.mxu0
  %v1487 = vadd.f32 %v1422, %v1486
  %1488 = vmatmul.f32.gmra.mxu0 %v101
  %v1489 = vpop.f32.mrf.mxu0
  %v1490 = vadd.f32 %v1425, %v1489
  %1491 = vmatmul.f32.gmra.mxu0 %v111
  %v1492 = vpop.f32.mrf.mxu0
  %v1493 = vadd.f32 %v1428, %v1492
  %1494 = vmatmul.f32.gmra.mxu0 %v121
  %v1495 = vpop.f32.mrf.mxu0
  %v1496 = vadd.f32 %v1431, %v1495
  %1497 = vmatmul.f32.gmra.mxu0 %v131
  %v1498 = vpop.f32.mrf.mxu0
  %v1499 = vadd.f32 %v1434, %v1498
  %1500 = vmatmul.f32.gmra.mxu0 %v141
  %v1501 = vpop.f32.mrf.mxu0
  %v1502 = vadd.f32 %v1437, %v1501
  %1503 = vmatmul.f32.gmra.mxu0 %v151
  %v1504 = vpop.f32.mrf.mxu0
  %v1505 = vadd.f32 %v1440, %v1504
  %1506 = vmatmul.f32.gmra.mxu0 %v161
  %v1507 = vpop.f32.mrf.mxu0
  %v1508 = vadd.f32 %v1443, %v1507
  %1509 = vmatmul.f32.gmra.mxu0 %v171
  %v1510 = vpop.f32.mrf.mxu0
  %v1511 = vadd.f32 %v1446, %v1510
  %1512 = vdwg.mxu0
  %1513 = vmatpush.msra.mxu0 %v368
  %1514 = vmatpush.msra.mxu0 %v366
  %1515 = vmatpush.msra.mxu0 %v364
  %1516 = vmatpush.msra.mxu0 %v362
  %1517 = vmatpush.msra.mxu0 %v360
  %1518 = vmatpush.msra.mxu0 %v358
  %1519 = vmatpush.msra.mxu0 %v356
  %1520 = vmatpush.msra.mxu0 %v354
  %1521 = vmatpush.msra.mxu0 %v352
  %1522 = vmatpush.msra.mxu0 %v350
  %1523 = vmatpush.msra.mxu0 %v348
  %1524 = vmatpush.msra.mxu0 %v346
  %1525 = vmatpush.msra.mxu0 %v344
  %1526 = vmatpush.msra.mxu0 %v342
  %1527 = vmatpush.msra.mxu0 %v340
  %1528 = vmatpush.msra.mxu0 %v338
  %1529 = vmatmul.f32.gmra.mxu0 %v22
  %v1530 = vpop.f32.mrf.mxu0
  %v1531 = vadd.f32 %v1466, %v1530
  %1532 = vmatmul.f32.gmra.mxu0 %v32
  %v1533 = vpop.f32.mrf.mxu0
  %v1534 = vadd.f32 %v1469, %v1533
  %1535 = vmatmul.f32.gmra.mxu0 %v42
  %v1536 = vpop.f32.mrf.mxu0
  %v1537 = vadd.f32 %v1472, %v1536
  %1538 = vmatmul.f32.gmra.mxu0 %v52
  %v1539 = vpop.f32.mrf.mxu0
  %v1540 = vadd.f32 %v1475, %v1539
  %1541 = vmatmul.f32.gmra.mxu0 %v62
  %v1542 = vpop.f32.mrf.mxu0
  %v1543 = vadd.f32 %v1478, %v1542
  %1544 = vmatmul.f32.gmra.mxu0 %v72
  %v1545 = vpop.f32.mrf.mxu0
  %v1546 = vadd.f32 %v1481, %v1545
  %1547 = vmatmul.f32.gmra.mxu0 %v82
  %v1548 = vpop.f32.mrf.mxu0
  %v1549 = vadd.f32 %v1484, %v1548
  %1550 = vmatmul.f32.gmra.mxu0 %v92
  %v1551 = vpop.f32.mrf.mxu0
  %v1552 = vadd.f32 %v1487, %v1551
  %1553 = vmatmul.f32.gmra.mxu0 %v102
  %v1554 = vpop.f32.mrf.mxu0
  %v1555 = vadd.f32 %v1490, %v1554
  %1556 = vmatmul.f32.gmra.mxu0 %v112
  %v1557 = vpop.f32.mrf.mxu0
  %v1558 = vadd.f32 %v1493, %v1557
  %1559 = vmatmul.f32.gmra.mxu0 %v122
  %v1560 = vpop.f32.mrf.mxu0
  %v1561 = vadd.f32 %v1496, %v1560
  %1562 = vmatmul.f32.gmra.mxu0 %v132
  %v1563 = vpop.f32.mrf.mxu0
  %v1564 = vadd.f32 %v1499, %v1563
  %1565 = vmatmul.f32.gmra.mxu0 %v142
  %v1566 = vpop.f32.mrf.mxu0
  %v1567 = vadd.f32 %v1502, %v1566
  %1568 = vmatmul.f32.gmra.mxu0 %v152
  %v1569 = vpop.f32.mrf.mxu0
  %v1570 = vadd.f32 %v1505, %v1569
  %1571 = vmatmul.f32.gmra.mxu0 %v162
  %v1572 = vpop.f32.mrf.mxu0
  %v1573 = vadd.f32 %v1508, %v1572
  %1574 = vmatmul.f32.gmra.mxu0 %v172
  %v1575 = vpop.f32.mrf.mxu0
  %v1576 = vadd.f32 %v1511, %v1575
  %1577 = vdwg.mxu0
  %1578 = vmatpush.msra.mxu0 %v400
  %1579 = vmatpush.msra.mxu0 %v398
  %1580 = vmatpush.msra.mxu0 %v396
  %1581 = vmatpush.msra.mxu0 %v394
  %1582 = vmatpush.msra.mxu0 %v392
  %1583 = vmatpush.msra.mxu0 %v390
  %1584 = vmatpush.msra.mxu0 %v388
  %1585 = vmatpush.msra.mxu0 %v386
  %1586 = vmatpush.msra.mxu0 %v384
  %1587 = vmatpush.msra.mxu0 %v382
  %1588 = vmatpush.msra.mxu0 %v380
  %1589 = vmatpush.msra.mxu0 %v378
  %1590 = vmatpush.msra.mxu0 %v376
  %1591 = vmatpush.msra.mxu0 %v374
  %1592 = vmatpush.msra.mxu0 %v372
  %1593 = vmatpush.msra.mxu0 %v370
  %1594 = vmatmul.f32.gmra.mxu0 %v23
  %v1595 = vpop.f32.mrf.mxu0
  %v1596 = vadd.f32 %v1531, %v1595
  %1597 = vmatmul.f32.gmra.mxu0 %v33
  %v1598 = vpop.f32.mrf.mxu0
  %v1599 = vadd.f32 %v1534, %v1598
  %1600 = vmatmul.f32.gmra.mxu0 %v43
  %v1601 = vpop.f32.mrf.mxu0
  %v1602 = vadd.f32 %v1537, %v1601
  %1603 = vmatmul.f32.gmra.mxu0 %v53
  %v1604 = vpop.f32.mrf.mxu0
  %v1605 = vadd.f32 %v1540, %v1604
  %1606 = vmatmul.f32.gmra.mxu0 %v63
  %v1607 = vpop.f32.mrf.mxu0
  %v1608 = vadd.f32 %v1543, %v1607
  %1609 = vmatmul.f32.gmra.mxu0 %v73
  %v1610 = vpop.f32.mrf.mxu0
  %v1611 = vadd.f32 %v1546, %v1610
  %1612 = vmatmul.f32.gmra.mxu0 %v83
  %v1613 = vpop.f32.mrf.mxu0
  %v1614 = vadd.f32 %v1549, %v1613
  %1615 = vmatmul.f32.gmra.mxu0 %v93
  %v1616 = vpop.f32.mrf.mxu0
  %v1617 = vadd.f32 %v1552, %v1616
  %1618 = vmatmul.f32.gmra.mxu0 %v103
  %v1619 = vpop.f32.mrf.mxu0
  %v1620 = vadd.f32 %v1555, %v1619
  %1621 = vmatmul.f32.gmra.mxu0 %v113
  %v1622 = vpop.f32.mrf.mxu0
  %v1623 = vadd.f32 %v1558, %v1622
  %1624 = vmatmul.f32.gmra.mxu0 %v123
  %v1625 = vpop.f32.mrf.mxu0
  %v1626 = vadd.f32 %v1561, %v1625
  %1627 = vmatmul.f32.gmra.mxu0 %v133
  %v1628 = vpop.f32.mrf.mxu0
  %v1629 = vadd.f32 %v1564, %v1628
  %1630 = vmatmul.f32.gmra.mxu0 %v143
  %v1631 = vpop.f32.mrf.mxu0
  %v1632 = vadd.f32 %v1567, %v1631
  %1633 = vmatmul.f32.gmra.mxu0 %v153
  %v1634 = vpop.f32.mrf.mxu0
  %v1635 = vadd.f32 %v1570, %v1634
  %1636 = vmatmul.f32.gmra.mxu0 %v163
  %v1637 = vpop.f32.mrf.mxu0
  %v1638 = vadd.f32 %v1573, %v1637
  %1639 = vmatmul.f32.gmra.mxu0 %v173
  %v1640 = vpop.f32.mrf.mxu0
  %v1641 = vadd.f32 %v1576, %v1640
  %1642 = vdwg.mxu0
  %1643 = vmatpush.msra.mxu0 %v432
  %1644 = vmatpush.msra.mxu0 %v430
  %1645 = vmatpush.msra.mxu0 %v428
  %1646 = vmatpush.msra.mxu0 %v426
  %1647 = vmatpush.msra.mxu0 %v424
  %1648 = vmatpush.msra.mxu0 %v422
  %1649 = vmatpush.msra.mxu0 %v420
  %1650 = vmatpush.msra.mxu0 %v418
  %1651 = vmatpush.msra.mxu0 %v416
  %1652 = vmatpush.msra.mxu0 %v414
  %1653 = vmatpush.msra.mxu0 %v412
  %1654 = vmatpush.msra.mxu0 %v410
  %1655 = vmatpush.msra.mxu0 %v408
  %1656 = vmatpush.msra.mxu0 %v406
  %1657 = vmatpush.msra.mxu0 %v404
  %1658 = vmatpush.msra.mxu0 %v402
  %1659 = vmatmul.f32.gmra.mxu0 %v24
  %v1660 = vpop.f32.mrf.mxu0
  %v1661 = vadd.f32 %v1596, %v1660
  %1662 = vmatmul.f32.gmra.mxu0 %v34
  %v1663 = vpop.f32.mrf.mxu0
  %v1664 = vadd.f32 %v1599, %v1663
  %1665 = vmatmul.f32.gmra.mxu0 %v44
  %v1666 = vpop.f32.mrf.mxu0
  %v1667 = vadd.f32 %v1602, %v1666
  %1668 = vmatmul.f32.gmra.mxu0 %v54
  %v1669 = vpop.f32.mrf.mxu0
  %v1670 = vadd.f32 %v1605, %v1669
  %1671 = vmatmul.f32.gmra.mxu0 %v64
  %v1672 = vpop.f32.mrf.mxu0
  %v1673 = vadd.f32 %v1608, %v1672
  %1674 = vmatmul.f32.gmra.mxu0 %v74
  %v1675 = vpop.f32.mrf.mxu0
  %v1676 = vadd.f32 %v1611, %v1675
  %1677 = vmatmul.f32.gmra.mxu0 %v84
  %v1678 = vpop.f32.mrf.mxu0
  %v1679 = vadd.f32 %v1614, %v1678
  %1680 = vmatmul.f32.gmra.mxu0 %v94
  %v1681 = vpop.f32.mrf.mxu0
  %v1682 = vadd.f32 %v1617, %v1681
  %1683 = vmatmul.f32.gmra.mxu0 %v104
  %v1684 = vpop.f32.mrf.mxu0
  %v1685 = vadd.f32 %v1620, %v1684
  %1686 = vmatmul.f32.gmra.mxu0 %v114
  %v1687 = vpop.f32.mrf.mxu0
  %v1688 = vadd.f32 %v1623, %v1687
  %1689 = vmatmul.f32.gmra.mxu0 %v124
  %v1690 = vpop.f32.mrf.mxu0
  %v1691 = vadd.f32 %v1626, %v1690
  %1692 = vmatmul.f32.gmra.mxu0 %v134
  %v1693 = vpop.f32.mrf.mxu0
  %v1694 = vadd.f32 %v1629, %v1693
  %1695 = vmatmul.f32.gmra.mxu0 %v144
  %v1696 = vpop.f32.mrf.mxu0
  %v1697 = vadd.f32 %v1632, %v1696
  %1698 = vmatmul.f32.gmra.mxu0 %v154
  %v1699 = vpop.f32.mrf.mxu0
  %v1700 = vadd.f32 %v1635, %v1699
  %1701 = vmatmul.f32.gmra.mxu0 %v164
  %v1702 = vpop.f32.mrf.mxu0
  %v1703 = vadd.f32 %v1638, %v1702
  %1704 = vmatmul.f32.gmra.mxu0 %v174
  %v1705 = vpop.f32.mrf.mxu0
  %v1706 = vadd.f32 %v1641, %v1705
  %1707 = vdwg.mxu0
  %1708 = vmatpush.msra.mxu0 %v464
  %1709 = vmatpush.msra.mxu0 %v462
  %1710 = vmatpush.msra.mxu0 %v460
  %1711 = vmatpush.msra.mxu0 %v458
  %1712 = vmatpush.msra.mxu0 %v456
  %1713 = vmatpush.msra.mxu0 %v454
  %1714 = vmatpush.msra.mxu0 %v452
  %1715 = vmatpush.msra.mxu0 %v450
  %1716 = vmatpush.msra.mxu0 %v448
  %1717 = vmatpush.msra.mxu0 %v446
  %1718 = vmatpush.msra.mxu0 %v444
  %1719 = vmatpush.msra.mxu0 %v442
  %1720 = vmatpush.msra.mxu0 %v440
  %1721 = vmatpush.msra.mxu0 %v438
  %1722 = vmatpush.msra.mxu0 %v436
  %1723 = vmatpush.msra.mxu0 %v434
  %1724 = vmatmul.f32.gmra.mxu0 %v25
  %v1725 = vpop.f32.mrf.mxu0
  %v1726 = vadd.f32 %v1661, %v1725
  %1727 = vmatmul.f32.gmra.mxu0 %v35
  %v1728 = vpop.f32.mrf.mxu0
  %v1729 = vadd.f32 %v1664, %v1728
  %1730 = vmatmul.f32.gmra.mxu0 %v45
  %v1731 = vpop.f32.mrf.mxu0
  %v1732 = vadd.f32 %v1667, %v1731
  %1733 = vmatmul.f32.gmra.mxu0 %v55
  %v1734 = vpop.f32.mrf.mxu0
  %v1735 = vadd.f32 %v1670, %v1734
  %1736 = vmatmul.f32.gmra.mxu0 %v65
  %v1737 = vpop.f32.mrf.mxu0
  %v1738 = vadd.f32 %v1673, %v1737
  %1739 = vmatmul.f32.gmra.mxu0 %v75
  %v1740 = vpop.f32.mrf.mxu0
  %v1741 = vadd.f32 %v1676, %v1740
  %1742 = vmatmul.f32.gmra.mxu0 %v85
  %v1743 = vpop.f32.mrf.mxu0
  %v1744 = vadd.f32 %v1679, %v1743
  %1745 = vmatmul.f32.gmra.mxu0 %v95
  %v1746 = vpop.f32.mrf.mxu0
  %v1747 = vadd.f32 %v1682, %v1746
  %1748 = vmatmul.f32.gmra.mxu0 %v105
  %v1749 = vpop.f32.mrf.mxu0
  %v1750 = vadd.f32 %v1685, %v1749
  %1751 = vmatmul.f32.gmra.mxu0 %v115
  %v1752 = vpop.f32.mrf.mxu0
  %v1753 = vadd.f32 %v1688, %v1752
  %1754 = vmatmul.f32.gmra.mxu0 %v125
  %v1755 = vpop.f32.mrf.mxu0
  %v1756 = vadd.f32 %v1691, %v1755
  %1757 = vmatmul.f32.gmra.mxu0 %v135
  %v1758 = vpop.f32.mrf.mxu0
  %v1759 = vadd.f32 %v1694, %v1758
  %1760 = vmatmul.f32.gmra.mxu0 %v145
  %v1761 = vpop.f32.mrf.mxu0
  %v1762 = vadd.f32 %v1697, %v1761
  %1763 = vmatmul.f32.gmra.mxu0 %v155
  %v1764 = vpop.f32.mrf.mxu0
  %v1765 = vadd.f32 %v1700, %v1764
  %1766 = vmatmul.f32.gmra.mxu0 %v165
  %v1767 = vpop.f32.mrf.mxu0
  %v1768 = vadd.f32 %v1703, %v1767
  %1769 = vmatmul.f32.gmra.mxu0 %v175
  %v1770 = vpop.f32.mrf.mxu0
  %v1771 = vadd.f32 %v1706, %v1770
  %1772 = vdwg.mxu0
  %1773 = vmatpush.msra.mxu0 0.0
  %1774 = vmatpush.msra.mxu0 0.0
  %1775 = vmatpush.msra.mxu0 0.0
  %1776 = vmatpush.msra.mxu0 0.0
  %1777 = vmatpush.msra.mxu0 %v488
  %1778 = vmatpush.msra.mxu0 %v486
  %1779 = vmatpush.msra.mxu0 %v484
  %1780 = vmatpush.msra.mxu0 %v482
  %1781 = vmatpush.msra.mxu0 %v480
  %1782 = vmatpush.msra.mxu0 %v478
  %1783 = vmatpush.msra.mxu0 %v476
  %1784 = vmatpush.msra.mxu0 %v474
  %1785 = vmatpush.msra.mxu0 %v472
  %1786 = vmatpush.msra.mxu0 %v470
  %1787 = vmatpush.msra.mxu0 %v468
  %1788 = vmatpush.msra.mxu0 %v466
  %1789 = vmatmul.f32.gmra.mxu0 %v491
  %v1790 = vpop.f32.mrf.mxu0
  %v1791 = vadd.f32 %v1726, %v1790
  %1792 = vmatmul.f32.gmra.mxu0 %v494
  %v1793 = vpop.f32.mrf.mxu0
  %v1794 = vadd.f32 %v1729, %v1793
  %1795 = vmatmul.f32.gmra.mxu0 %v497
  %v1796 = vpop.f32.mrf.mxu0
  %v1797 = vadd.f32 %v1732, %v1796
  %1798 = vmatmul.f32.gmra.mxu0 %v500
  %v1799 = vpop.f32.mrf.mxu0
  %v1800 = vadd.f32 %v1735, %v1799
  %1801 = vmatmul.f32.gmra.mxu0 %v503
  %v1802 = vpop.f32.mrf.mxu0
  %v1803 = vadd.f32 %v1738, %v1802
  %1804 = vmatmul.f32.gmra.mxu0 %v506
  %v1805 = vpop.f32.mrf.mxu0
  %v1806 = vadd.f32 %v1741, %v1805
  %1807 = vmatmul.f32.gmra.mxu0 %v509
  %v1808 = vpop.f32.mrf.mxu0
  %v1809 = vadd.f32 %v1744, %v1808
  %1810 = vmatmul.f32.gmra.mxu0 %v512
  %v1811 = vpop.f32.mrf.mxu0
  %v1812 = vadd.f32 %v1747, %v1811
  %1813 = vmatmul.f32.gmra.mxu0 %v515
  %v1814 = vpop.f32.mrf.mxu0
  %v1815 = vadd.f32 %v1750, %v1814
  %1816 = vmatmul.f32.gmra.mxu0 %v518
  %v1817 = vpop.f32.mrf.mxu0
  %v1818 = vadd.f32 %v1753, %v1817
  %1819 = vmatmul.f32.gmra.mxu0 %v521
  %v1820 = vpop.f32.mrf.mxu0
  %v1821 = vadd.f32 %v1756, %v1820
  %1822 = vmatmul.f32.gmra.mxu0 %v524
  %v1823 = vpop.f32.mrf.mxu0
  %v1824 = vadd.f32 %v1759, %v1823
  %1825 = vmatmul.f32.gmra.mxu0 %v527
  %v1826 = vpop.f32.mrf.mxu0
  %v1827 = vadd.f32 %v1762, %v1826
  %1828 = vmatmul.f32.gmra.mxu0 %v530
  %v1829 = vpop.f32.mrf.mxu0
  %v1830 = vadd.f32 %v1765, %v1829
  %1831 = vmatmul.f32.gmra.mxu0 %v533
  %v1832 = vpop.f32.mrf.mxu0
  %v1833 = vadd.f32 %v1768, %v1832
  %1834 = vmatmul.f32.gmra.mxu0 %v536
  %v1835 = vpop.f32.mrf.mxu0
  %v1836 = vadd.f32 %v1771, %v1835
  %1837 = vdwg.mxu0
  %vm1838 = vcmask 556032
  %v1839 = vsel %vm1838, %v1791, 0.0
  %v1840 = vadd.f32 %v1141, %v1839
  %1841 = vadd.xlane.f32.xlu0 %v1840
  %v1842 = vpop.xlane.xlu0 %1841
  %v1843 = vsel %vm1838, %v1794, 0.0
  %v1844 = vadd.f32 %v1144, %v1843
  %1845 = vadd.xlane.f32.xlu0 %v1844
  %v1846 = vpop.xlane.xlu0 %1845
  %v1847 = vsel %vm1838, %v1797, 0.0
  %v1848 = vadd.f32 %v1147, %v1847
  %1849 = vadd.xlane.f32.xlu0 %v1848
  %v1850 = vpop.xlane.xlu0 %1849
  %v1851 = vsel %vm1838, %v1800, 0.0
  %v1852 = vadd.f32 %v1150, %v1851
  %1853 = vadd.xlane.f32.xlu0 %v1852
  %v1854 = vpop.xlane.xlu0 %1853
  %v1855 = vsel %vm1838, %v1803, 0.0
  %v1856 = vadd.f32 %v1153, %v1855
  %1857 = vadd.xlane.f32.xlu0 %v1856
  %v1858 = vpop.xlane.xlu0 %1857
  %v1859 = vsel %vm1838, %v1806, 0.0
  %v1860 = vadd.f32 %v1156, %v1859
  %1861 = vadd.xlane.f32.xlu0 %v1860
  %v1862 = vpop.xlane.xlu0 %1861
  %v1863 = vsel %vm1838, %v1809, 0.0
  %v1864 = vadd.f32 %v1159, %v1863
  %1865 = vadd.xlane.f32.xlu0 %v1864
  %v1866 = vpop.xlane.xlu0 %1865
  %v1867 = vsel %vm1838, %v1812, 0.0
  %v1868 = vadd.f32 %v1162, %v1867
  %1869 = vadd.xlane.f32.xlu0 %v1868
  %v1870 = vpop.xlane.xlu0 %1869
  %v1871 = vsel %vm1838, %v1815, 0.0
  %v1872 = vadd.f32 %v1165, %v1871
  %1873 = vadd.xlane.f32.xlu0 %v1872
  %v1874 = vpop.xlane.xlu0 %1873
  %v1875 = vsel %vm1838, %v1818, 0.0
  %v1876 = vadd.f32 %v1168, %v1875
  %1877 = vadd.xlane.f32.xlu0 %v1876
  %v1878 = vpop.xlane.xlu0 %1877
  %v1879 = vsel %vm1838, %v1821, 0.0
  %v1880 = vadd.f32 %v1171, %v1879
  %1881 = vadd.xlane.f32.xlu0 %v1880
  %v1882 = vpop.xlane.xlu0 %1881
  %v1883 = vsel %vm1838, %v1824, 0.0
  %v1884 = vadd.f32 %v1174, %v1883
  %1885 = vadd.xlane.f32.xlu0 %v1884
  %v1886 = vpop.xlane.xlu0 %1885
  %v1887 = vsel %vm1838, %v1827, 0.0
  %v1888 = vadd.f32 %v1177, %v1887
  %1889 = vadd.xlane.f32.xlu0 %v1888
  %v1890 = vpop.xlane.xlu0 %1889
  %v1891 = vsel %vm1838, %v1830, 0.0
  %v1892 = vadd.f32 %v1180, %v1891
  %1893 = vadd.xlane.f32.xlu0 %v1892
  %v1894 = vpop.xlane.xlu0 %1893
  %v1895 = vsel %vm1838, %v1833, 0.0
  %v1896 = vadd.f32 %v1183, %v1895
  %1897 = vadd.xlane.f32.xlu0 %v1896
  %v1898 = vpop.xlane.xlu0 %1897
  %v1899 = vsel %vm1838, %v1836, 0.0
  %v1900 = vadd.f32 %v1186, %v1899
  %1901 = vadd.xlane.f32.xlu0 %v1900
  %v1902 = vpop.xlane.xlu0 %1901
  %v1903 = vrcp.pop 196.0
  %v1904 = vmul.f32 196.0, %v1903
  %v1905 = vsub.f32 1.0, %v1904
  %v1906 = vmul.f32 %v1903, %v1905
  %v1907 = vadd.f32 %v1903, %v1906
  %vm1908 = vweird.f32 %v1903
  %v1909 = vsel %vm1908, %v1903, %v1907
  %v1910 = vmul.f32 %v1842, %v1909
  %v1911 = vmul.f32 %v1846, %v1909
  %v1912 = vmul.f32 %v1850, %v1909
  %v1913 = vmul.f32 %v1854, %v1909
  %v1914 = vmul.f32 %v1858, %v1909
  %v1915 = vmul.f32 %v1862, %v1909
  %v1916 = vmul.f32 %v1866, %v1909
  %v1917 = vmul.f32 %v1870, %v1909
  %v1918 = vmul.f32 %v1874, %v1909
  %v1919 = vmul.f32 %v1878, %v1909
  %v1920 = vmul.f32 %v1882, %v1909
  %v1921 = vmul.f32 %v1886, %v1909
  %v1922 = vmul.f32 %v1890, %v1909
  %v1923 = vmul.f32 %v1894, %v1909
  %v1924 = vmul.f32 %v1898, %v1909
  %v1925 = vmul.f32 %v1902, %v1909
  %v1926 = vsub.f32 %v1141, %v1910
  %v1927 = vsub.f32 %v1791, %v1910
  %v1928 = vsub.f32 %v1144, %v1911
  %v1929 = vsub.f32 %v1794, %v1911
  %v1930 = vsub.f32 %v1147, %v1912
  %v1931 = vsub.f32 %v1797, %v1912
  %v1932 = vsub.f32 %v1150, %v1913
  %v1933 = vsub.f32 %v1800, %v1913
  %v1934 = vsub.f32 %v1153, %v1914
  %v1935 = vsub.f32 %v1803, %v1914
  %v1936 = vsub.f32 %v1156, %v1915
  %v1937 = vsub.f32 %v1806, %v1915
  %v1938 = vsub.f32 %v1159, %v1916
  %v1939 = vsub.f32 %v1809, %v1916
  %v1940 = vsub.f32 %v1162, %v1917
  %v1941 = vsub.f32 %v1812, %v1917
  %v1942 = vsub.f32 %v1165, %v1918
  %v1943 = vsub.f32 %v1815, %v1918
  %v1944 = vsub.f32 %v1168, %v1919
  %v1945 = vsub.f32 %v1818, %v1919
  %v1946 = vsub.f32 %v1171, %v1920
  %v1947 = vsub.f32 %v1821, %v1920
  %v1948 = vsub.f32 %v1174, %v1921
  %v1949 = vsub.f32 %v1824, %v1921
  %v1950 = vsub.f32 %v1177, %v1922
  %v1951 = vsub.f32 %v1827, %v1922
  %v1952 = vsub.f32 %v1180, %v1923
  %v1953 = vsub.f32 %v1830, %v1923
  %v1954 = vsub.f32 %v1183, %v1924
  %v1955 = vsub.f32 %v1833, %v1924
  %v1956 = vsub.f32 %v1186, %v1925
  %v1957 = vsub.f32 %v1836, %v1925
  %v1958 = vmul.f32 %v1926, %v1926
  %v1959 = vmul.f32 %v1927, %v1927
  %v1960 = vmul.f32 %v1928, %v1928
  %v1961 = vmul.f32 %v1929, %v1929
  %v1962 = vmul.f32 %v1930, %v1930
  %v1963 = vmul.f32 %v1931, %v1931
  %v1964 = vmul.f32 %v1932, %v1932
  %v1965 = vmul.f32 %v1933, %v1933
  %v1966 = vmul.f32 %v1934, %v1934
  %v1967 = vmul.f32 %v1935, %v1935
  %v1968 = vmul.f32 %v1936, %v1936
  %v1969 = vmul.f32 %v1937, %v1937
  %v1970 = vmul.f32 %v1938, %v1938
  %v1971 = vmul.f32 %v1939, %v1939
  %v1972 = vmul.f32 %v1940, %v1940
  %v1973 = vmul.f32 %v1941, %v1941
  %v1974 = vmul.f32 %v1942, %v1942
  %v1975 = vmul.f32 %v1943, %v1943
  %v1976 = vmul.f32 %v1944, %v1944
  %v1977 = vmul.f32 %v1945, %v1945
  %v1978 = vmul.f32 %v1946, %v1946
  %v1979 = vmul.f32 %v1947, %v1947
  %v1980 = vmul.f32 %v1948, %v1948
  %v1981 = vmul.f32 %v1949, %v1949
  %v1982 = vmul.f32 %v1950, %v1950
  %v1983 = vmul.f32 %v1951, %v1951
  %v1984 = vmul.f32 %v1952, %v1952
  %v1985 = vmul.f32 %v1953, %v1953
  %v1986 = vmul.f32 %v1954, %v1954
  %v1987 = vmul.f32 %v1955, %v1955
  %v1988 = vmul.f32 %v1956, %v1956
  %v1989 = vmul.f32 %v1957, %v1957
  %v1990 = vsel %vm1838, %v1959, 0.0
  %v1991 = vadd.f32 %v1958, %v1990
  %1992 = vadd.xlane.f32.xlu0 %v1991
  %v1993 = vpop.xlane.xlu0 %1992
  %v1994 = vsel %vm1838, %v1961, 0.0
  %v1995 = vadd.f32 %v1960, %v1994
  %1996 = vadd.xlane.f32.xlu0 %v1995
  %v1997 = vpop.xlane.xlu0 %1996
  %v1998 = vsel %vm1838, %v1963, 0.0
  %v1999 = vadd.f32 %v1962, %v1998
  %2000 = vadd.xlane.f32.xlu0 %v1999
  %v2001 = vpop.xlane.xlu0 %2000
  %v2002 = vsel %vm1838, %v1965, 0.0
  %v2003 = vadd.f32 %v1964, %v2002
  %2004 = vadd.xlane.f32.xlu0 %v2003
  %v2005 = vpop.xlane.xlu0 %2004
  %v2006 = vsel %vm1838, %v1967, 0.0
  %v2007 = vadd.f32 %v1966, %v2006
  %2008 = vadd.xlane.f32.xlu0 %v2007
  %v2009 = vpop.xlane.xlu0 %2008
  %v2010 = vsel %vm1838, %v1969, 0.0
  %v2011 = vadd.f32 %v1968, %v2010
  %2012 = vadd.xlane.f32.xlu0 %v2011
  %v2013 = vpop.xlane.xlu0 %2012
  %v2014 = vsel %vm1838, %v1971, 0.0
  %v2015 = vadd.f32 %v1970, %v2014
  %2016 = vadd.xlane.f32.xlu0 %v2015
  %v2017 = vpop.xlane.xlu0 %2016
  %v2018 = vsel %vm1838, %v1973, 0.0
  %v2019 = vadd.f32 %v1972, %v2018
  %2020 = vadd.xlane.f32.xlu0 %v2019
  %v2021 = vpop.xlane.xlu0 %2020
  %v2022 = vsel %vm1838, %v1975, 0.0
  %v2023 = vadd.f32 %v1974, %v2022
  %2024 = vadd.xlane.f32.xlu0 %v2023
  %v2025 = vpop.xlane.xlu0 %2024
  %v2026 = vsel %vm1838, %v1977, 0.0
  %v2027 = vadd.f32 %v1976, %v2026
  %2028 = vadd.xlane.f32.xlu0 %v2027
  %v2029 = vpop.xlane.xlu0 %2028
  %v2030 = vsel %vm1838, %v1979, 0.0
  %v2031 = vadd.f32 %v1978, %v2030
  %2032 = vadd.xlane.f32.xlu0 %v2031
  %v2033 = vpop.xlane.xlu0 %2032
  %v2034 = vsel %vm1838, %v1981, 0.0
  %v2035 = vadd.f32 %v1980, %v2034
  %2036 = vadd.xlane.f32.xlu0 %v2035
  %v2037 = vpop.xlane.xlu0 %2036
  %v2038 = vsel %vm1838, %v1983, 0.0
  %v2039 = vadd.f32 %v1982, %v2038
  %2040 = vadd.xlane.f32.xlu0 %v2039
  %v2041 = vpop.xlane.xlu0 %2040
  %v2042 = vsel %vm1838, %v1985, 0.0
  %v2043 = vadd.f32 %v1984, %v2042
  %2044 = vadd.xlane.f32.xlu0 %v2043
  %v2045 = vpop.xlane.xlu0 %2044
  %v2046 = vsel %vm1838, %v1987, 0.0
  %v2047 = vadd.f32 %v1986, %v2046
  %2048 = vadd.xlane.f32.xlu0 %v2047
  %v2049 = vpop.xlane.xlu0 %2048
  %v2050 = vsel %vm1838, %v1989, 0.0
  %v2051 = vadd.f32 %v1988, %v2050
  %2052 = vadd.xlane.f32.xlu0 %v2051
  %v2053 = vpop.xlane.xlu0 %2052
  %v2054 = vmul.f32 %v1993, %v1909
  %v2055 = vmul.f32 %v1997, %v1909
  %v2056 = vmul.f32 %v2001, %v1909
  %v2057 = vmul.f32 %v2005, %v1909
  %v2058 = vmul.f32 %v2009, %v1909
  %v2059 = vmul.f32 %v2013, %v1909
  %v2060 = vmul.f32 %v2017, %v1909
  %v2061 = vmul.f32 %v2021, %v1909
  %v2062 = vmul.f32 %v2025, %v1909
  %v2063 = vmul.f32 %v2029, %v1909
  %v2064 = vmul.f32 %v2033, %v1909
  %v2065 = vmul.f32 %v2037, %v1909
  %v2066 = vmul.f32 %v2041, %v1909
  %v2067 = vmul.f32 %v2045, %v1909
  %v2068 = vmul.f32 %v2049, %v1909
  %v2069 = vmul.f32 %v2053, %v1909
  %v2070 = vadd.f32 %v2054, 1e-05
  %v2071 = vadd.f32 %v2055, 1e-05
  %v2072 = vadd.f32 %v2056, 1e-05
  %v2073 = vadd.f32 %v2057, 1e-05
  %v2074 = vadd.f32 %v2058, 1e-05
  %v2075 = vadd.f32 %v2059, 1e-05
  %v2076 = vadd.f32 %v2060, 1e-05
  %v2077 = vadd.f32 %v2061, 1e-05
  %v2078 = vadd.f32 %v2062, 1e-05
  %v2079 = vadd.f32 %v2063, 1e-05
  %v2080 = vadd.f32 %v2064, 1e-05
  %v2081 = vadd.f32 %v2065, 1e-05
  %v2082 = vadd.f32 %v2066, 1e-05
  %v2083 = vadd.f32 %v2067, 1e-05
  %v2084 = vadd.f32 %v2068, 1e-05
  %v2085 = vadd.f32 %v2069, 1e-05
  %v2086 = vrsqrt.pop %v2070
  %v2087 = vmul.f32 %v2086, %v2070
  %v2088 = vmul.f32 %v2087, %v2086
  %v2089 = vmul.f32 0.5, %v2088
  %v2090 = vsub.f32 1.5, %v2089
  %v2091 = vmul.f32 %v2086, %v2090
  %vm2092 = vweird.f32 %v2070
  %vm2093 = vweird.f32 %v2086
  %vm2094 = vmor %vm2092, %vm2093
  %v2095 = vsel %vm2094, %v2086, %v2091
  %v2096 = vrsqrt.pop %v2071
  %v2097 = vmul.f32 %v2096, %v2071
  %v2098 = vmul.f32 %v2097, %v2096
  %v2099 = vmul.f32 0.5, %v2098
  %v2100 = vsub.f32 1.5, %v2099
  %v2101 = vmul.f32 %v2096, %v2100
  %vm2102 = vweird.f32 %v2071
  %vm2103 = vweird.f32 %v2096
  %vm2104 = vmor %vm2102, %vm2103
  %v2105 = vsel %vm2104, %v2096, %v2101
  %v2106 = vrsqrt.pop %v2072
  %v2107 = vmul.f32 %v2106, %v2072
  %v2108 = vmul.f32 %v2107, %v2106
  %v2109 = vmul.f32 0.5, %v2108
  %v2110 = vsub.f32 1.5, %v2109
  %v2111 = vmul.f32 %v2106, %v2110
  %vm2112 = vweird.f32 %v2072
  %vm2113 = vweird.f32 %v2106
  %vm2114 = vmor %vm2112, %vm2113
  %v2115 = vsel %vm2114, %v2106, %v2111
  %v2116 = vrsqrt.pop %v2073
  %v2117 = vmul.f32 %v2116, %v2073
  %v2118 = vmul.f32 %v2117, %v2116
  %v2119 = vmul.f32 0.5, %v2118
  %v2120 = vsub.f32 1.5, %v2119
  %v2121 = vmul.f32 %v2116, %v2120
  %vm2122 = vweird.f32 %v2073
  %vm2123 = vweird.f32 %v2116
  %vm2124 = vmor %vm2122, %vm2123
  %v2125 = vsel %vm2124, %v2116, %v2121
  %v2126 = vrsqrt.pop %v2074
  %v2127 = vmul.f32 %v2126, %v2074
  %v2128 = vmul.f32 %v2127, %v2126
  %v2129 = vmul.f32 0.5, %v2128
  %v2130 = vsub.f32 1.5, %v2129
  %v2131 = vmul.f32 %v2126, %v2130
  %vm2132 = vweird.f32 %v2074
  %vm2133 = vweird.f32 %v2126
  %vm2134 = vmor %vm2132, %vm2133
  %v2135 = vsel %vm2134, %v2126, %v2131
  %v2136 = vrsqrt.pop %v2075
  %v2137 = vmul.f32 %v2136, %v2075
  %v2138 = vmul.f32 %v2137, %v2136
  %v2139 = vmul.f32 0.5, %v2138
  %v2140 = vsub.f32 1.5, %v2139
  %v2141 = vmul.f32 %v2136, %v2140
  %vm2142 = vweird.f32 %v2075
  %vm2143 = vweird.f32 %v2136
  %vm2144 = vmor %vm2142, %vm2143
  %v2145 = vsel %vm2144, %v2136, %v2141
  %v2146 = vrsqrt.pop %v2076
  %v2147 = vmul.f32 %v2146, %v2076
  %v2148 = vmul.f32 %v2147, %v2146
  %v2149 = vmul.f32 0.5, %v2148
  %v2150 = vsub.f32 1.5, %v2149
  %v2151 = vmul.f32 %v2146, %v2150
  %vm2152 = vweird.f32 %v2076
  %vm2153 = vweird.f32 %v2146
  %vm2154 = vmor %vm2152, %vm2153
  %v2155 = vsel %vm2154, %v2146, %v2151
  %v2156 = vrsqrt.pop %v2077
  %v2157 = vmul.f32 %v2156, %v2077
  %v2158 = vmul.f32 %v2157, %v2156
  %v2159 = vmul.f32 0.5, %v2158
  %v2160 = vsub.f32 1.5, %v2159
  %v2161 = vmul.f32 %v2156, %v2160
  %vm2162 = vweird.f32 %v2077
  %vm2163 = vweird.f32 %v2156
  %vm2164 = vmor %vm2162, %vm2163
  %v2165 = vsel %vm2164, %v2156, %v2161
  %v2166 = vrsqrt.pop %v2078
  %v2167 = vmul.f32 %v2166, %v2078
  %v2168 = vmul.f32 %v2167, %v2166
  %v2169 = vmul.f32 0.5, %v2168
  %v2170 = vsub.f32 1.5, %v2169
  %v2171 = vmul.f32 %v2166, %v2170
  %vm2172 = vweird.f32 %v2078
  %vm2173 = vweird.f32 %v2166
  %vm2174 = vmor %vm2172, %vm2173
  %v2175 = vsel %vm2174, %v2166, %v2171
  %v2176 = vrsqrt.pop %v2079
  %v2177 = vmul.f32 %v2176, %v2079
  %v2178 = vmul.f32 %v2177, %v2176
  %v2179 = vmul.f32 0.5, %v2178
  %v2180 = vsub.f32 1.5, %v2179
  %v2181 = vmul.f32 %v2176, %v2180
  %vm2182 = vweird.f32 %v2079
  %vm2183 = vweird.f32 %v2176
  %vm2184 = vmor %vm2182, %vm2183
  %v2185 = vsel %vm2184, %v2176, %v2181
  %v2186 = vrsqrt.pop %v2080
  %v2187 = vmul.f32 %v2186, %v2080
  %v2188 = vmul.f32 %v2187, %v2186
  %v2189 = vmul.f32 0.5, %v2188
  %v2190 = vsub.f32 1.5, %v2189
  %v2191 = vmul.f32 %v2186, %v2190
  %vm2192 = vweird.f32 %v2080
  %vm2193 = vweird.f32 %v2186
  %vm2194 = vmor %vm2192, %vm2193
  %v2195 = vsel %vm2194, %v2186, %v2191
  %v2196 = vrsqrt.pop %v2081
  %v2197 = vmul.f32 %v2196, %v2081
  %v2198 = vmul.f32 %v2197, %v2196
  %v2199 = vmul.f32 0.5, %v2198
  %v2200 = vsub.f32 1.5, %v2199
  %v2201 = vmul.f32 %v2196, %v2200
  %vm2202 = vweird.f32 %v2081
  %vm2203 = vweird.f32 %v2196
  %vm2204 = vmor %vm2202, %vm2203
  %v2205 = vsel %vm2204, %v2196, %v2201
  %v2206 = vrsqrt.pop %v2082
  %v2207 = vmul.f32 %v2206, %v2082
  %v2208 = vmul.f32 %v2207, %v2206
  %v2209 = vmul.f32 0.5, %v2208
  %v2210 = vsub.f32 1.5, %v2209
  %v2211 = vmul.f32 %v2206, %v2210
  %vm2212 = vweird.f32 %v2082
  %vm2213 = vweird.f32 %v2206
  %vm2214 = vmor %vm2212, %vm2213
  %v2215 = vsel %vm2214, %v2206, %v2211
  %v2216 = vrsqrt.pop %v2083
  %v2217 = vmul.f32 %v2216, %v2083
  %v2218 = vmul.f32 %v2217, %v2216
  %v2219 = vmul.f32 0.5, %v2218
  %v2220 = vsub.f32 1.5, %v2219
  %v2221 = vmul.f32 %v2216, %v2220
  %vm2222 = vweird.f32 %v2083
  %vm2223 = vweird.f32 %v2216
  %vm2224 = vmor %vm2222, %vm2223
  %v2225 = vsel %vm2224, %v2216, %v2221
  %v2226 = vrsqrt.pop %v2084
  %v2227 = vmul.f32 %v2226, %v2084
  %v2228 = vmul.f32 %v2227, %v2226
  %v2229 = vmul.f32 0.5, %v2228
  %v2230 = vsub.f32 1.5, %v2229
  %v2231 = vmul.f32 %v2226, %v2230
  %vm2232 = vweird.f32 %v2084
  %vm2233 = vweird.f32 %v2226
  %vm2234 = vmor %vm2232, %vm2233
  %v2235 = vsel %vm2234, %v2226, %v2231
  %v2236 = vrsqrt.pop %v2085
  %v2237 = vmul.f32 %v2236, %v2085
  %v2238 = vmul.f32 %v2237, %v2236
  %v2239 = vmul.f32 0.5, %v2238
  %v2240 = vsub.f32 1.5, %v2239
  %v2241 = vmul.f32 %v2236, %v2240
  %vm2242 = vweird.f32 %v2085
  %vm2243 = vweird.f32 %v2236
  %vm2244 = vmor %vm2242, %vm2243
  %v2245 = vsel %vm2244, %v2236, %v2241
  %v2246 = vld [vmem:[%s2] sm:$0x1]
  %2247 = vxpose.xlu0.b32.start [1/16] %v2246, 128
  %2248 = vxpose.xlu0.b32.cont [2/16] 0.0, 128
  %2249 = vxpose.xlu0.b32.cont [3/16] 0.0, 128
  %2250 = vxpose.xlu0.b32.cont [4/16] 0.0, 128
  %2251 = vxpose.xlu0.b32.cont [5/16] 0.0, 128
  %2252 = vxpose.xlu0.b32.cont [6/16] 0.0, 128
  %2253 = vxpose.xlu0.b32.cont [7/16] 0.0, 128
  %2254 = vxpose.xlu0.b32.cont [8/16] 0.0, 128
  %2255 = vxpose.xlu0.b32.cont [9/16] 0.0, 128
  %2256 = vxpose.xlu0.b32.cont [10/16] 0.0, 128
  %2257 = vxpose.xlu0.b32.cont [11/16] 0.0, 128
  %2258 = vxpose.xlu0.b32.cont [12/16] 0.0, 128
  %2259 = vxpose.xlu0.b32.cont [13/16] 0.0, 128
  %2260 = vxpose.xlu0.b32.cont [14/16] 0.0, 128
  %2261 = vxpose.xlu0.b32.cont [15/16] 0.0, 128
  %2262 = vxpose.xlu0.b32.end [16/16] 0.0, 128
  %v2263 = vpop.trf.xlu0
  %v2264 = vpop.trf.xlu0
  %v2265 = vpop.trf.xlu0
  %v2266 = vpop.trf.xlu0
  %v2267 = vpop.trf.xlu0
  %v2268 = vpop.trf.xlu0
  %v2269 = vpop.trf.xlu0
  %v2270 = vpop.trf.xlu0
  %v2271 = vpop.trf.xlu0
  %v2272 = vpop.trf.xlu0
  %v2273 = vpop.trf.xlu0
  %v2274 = vpop.trf.xlu0
  %v2275 = vpop.trf.xlu0
  %v2276 = vpop.trf.xlu0
  %v2277 = vpop.trf.xlu0
  %v2278 = vpop.trf.xlu0
  %v2279 = vld [vmem:[%s3] sm:$0x1]
  %2280 = vxpose.xlu0.b32.start [1/16] %v2279, 128
  %2281 = vxpose.xlu0.b32.cont [2/16] 0.0, 128
  %2282 = vxpose.xlu0.b32.cont [3/16] 0.0, 128
  %2283 = vxpose.xlu0.b32.cont [4/16] 0.0, 128
  %2284 = vxpose.xlu0.b32.cont [5/16] 0.0, 128
  %2285 = vxpose.xlu0.b32.cont [6/16] 0.0, 128
  %2286 = vxpose.xlu0.b32.cont [7/16] 0.0, 128
  %2287 = vxpose.xlu0.b32.cont [8/16] 0.0, 128
  %2288 = vxpose.xlu0.b32.cont [9/16] 0.0, 128
  %2289 = vxpose.xlu0.b32.cont [10/16] 0.0, 128
  %2290 = vxpose.xlu0.b32.cont [11/16] 0.0, 128
  %2291 = vxpose.xlu0.b32.cont [12/16] 0.0, 128
  %2292 = vxpose.xlu0.b32.cont [13/16] 0.0, 128
  %2293 = vxpose.xlu0.b32.cont [14/16] 0.0, 128
  %2294 = vxpose.xlu0.b32.cont [15/16] 0.0, 128
  %2295 = vxpose.xlu0.b32.end [16/16] 0.0, 128
  %v2296 = vpop.trf.xlu0
  %v2297 = vpop.trf.xlu0
  %v2298 = vpop.trf.xlu0
  %v2299 = vpop.trf.xlu0
  %v2300 = vpop.trf.xlu0
  %v2301 = vpop.trf.xlu0
  %v2302 = vpop.trf.xlu0
  %v2303 = vpop.trf.xlu0
  %v2304 = vpop.trf.xlu0
  %v2305 = vpop.trf.xlu0
  %v2306 = vpop.trf.xlu0
  %v2307 = vpop.trf.xlu0
  %v2308 = vpop.trf.xlu0
  %v2309 = vpop.trf.xlu0
  %v2310 = vpop.trf.xlu0
  %v2311 = vpop.trf.xlu0
  %v2312 = vmul.f32 %v2263, %v2095
  %v2313 = vmul.f32 %v2264, %v2105
  %v2314 = vmul.f32 %v2265, %v2115
  %v2315 = vmul.f32 %v2266, %v2125
  %v2316 = vmul.f32 %v2267, %v2135
  %v2317 = vmul.f32 %v2268, %v2145
  %v2318 = vmul.f32 %v2269, %v2155
  %v2319 = vmul.f32 %v2270, %v2165
  %v2320 = vmul.f32 %v2271, %v2175
  %v2321 = vmul.f32 %v2272, %v2185
  %v2322 = vmul.f32 %v2273, %v2195
  %v2323 = vmul.f32 %v2274, %v2205
  %v2324 = vmul.f32 %v2275, %v2215
  %v2325 = vmul.f32 %v2276, %v2225
  %v2326 = vmul.f32 %v2277, %v2235
  %v2327 = vmul.f32 %v2278, %v2245
  %2329 = vset.pattern.permute.xlu0 0
  %2330 = vperm.xlu0 %2329, %v2312
  %v2331 = vpop.permute.xlu0 %2330
  %2334 = vset.pattern.permute.xlu0 0
  %2335 = vperm.xlu0 %2334, %v2313
  %v2336 = vpop.permute.xlu0 %2335
  %2339 = vset.pattern.permute.xlu0 0
  %2340 = vperm.xlu0 %2339, %v2314
  %v2341 = vpop.permute.xlu0 %2340
  %2344 = vset.pattern.permute.xlu0 0
  %2345 = vperm.xlu0 %2344, %v2315
  %v2346 = vpop.permute.xlu0 %2345
  %2349 = vset.pattern.permute.xlu0 0
  %2350 = vperm.xlu0 %2349, %v2316
  %v2351 = vpop.permute.xlu0 %2350
  %2354 = vset.pattern.permute.xlu0 0
  %2355 = vperm.xlu0 %2354, %v2317
  %v2356 = vpop.permute.xlu0 %2355
  %2359 = vset.pattern.permute.xlu0 0
  %2360 = vperm.xlu0 %2359, %v2318
  %v2361 = vpop.permute.xlu0 %2360
  %2364 = vset.pattern.permute.xlu0 0
  %2365 = vperm.xlu0 %2364, %v2319
  %v2366 = vpop.permute.xlu0 %2365
  %2369 = vset.pattern.permute.xlu0 0
  %2370 = vperm.xlu0 %2369, %v2320
  %v2371 = vpop.permute.xlu0 %2370
  %2374 = vset.pattern.permute.xlu0 0
  %2375 = vperm.xlu0 %2374, %v2321
  %v2376 = vpop.permute.xlu0 %2375
  %2379 = vset.pattern.permute.xlu0 0
  %2380 = vperm.xlu0 %2379, %v2322
  %v2381 = vpop.permute.xlu0 %2380
  %2384 = vset.pattern.permute.xlu0 0
  %2385 = vperm.xlu0 %2384, %v2323
  %v2386 = vpop.permute.xlu0 %2385
  %2389 = vset.pattern.permute.xlu0 0
  %2390 = vperm.xlu0 %2389, %v2324
  %v2391 = vpop.permute.xlu0 %2390
  %2394 = vset.pattern.permute.xlu0 0
  %2395 = vperm.xlu0 %2394, %v2325
  %v2396 = vpop.permute.xlu0 %2395
  %2399 = vset.pattern.permute.xlu0 0
  %2400 = vperm.xlu0 %2399, %v2326
  %v2401 = vpop.permute.xlu0 %2400
  %2404 = vset.pattern.permute.xlu0 0
  %2405 = vperm.xlu0 %2404, %v2327
  %v2406 = vpop.permute.xlu0 %2405
  %v2408 = vmul.f32 %v1926, %v2331
  %v2409 = vmul.f32 %v1927, %v2331
  %v2410 = vmul.f32 %v1928, %v2336
  %v2411 = vmul.f32 %v1929, %v2336
  %v2412 = vmul.f32 %v1930, %v2341
  %v2413 = vmul.f32 %v1931, %v2341
  %v2414 = vmul.f32 %v1932, %v2346
  %v2415 = vmul.f32 %v1933, %v2346
  %v2416 = vmul.f32 %v1934, %v2351
  %v2417 = vmul.f32 %v1935, %v2351
  %v2418 = vmul.f32 %v1936, %v2356
  %v2419 = vmul.f32 %v1937, %v2356
  %v2420 = vmul.f32 %v1938, %v2361
  %v2421 = vmul.f32 %v1939, %v2361
  %v2422 = vmul.f32 %v1940, %v2366
  %v2423 = vmul.f32 %v1941, %v2366
  %v2424 = vmul.f32 %v1942, %v2371
  %v2425 = vmul.f32 %v1943, %v2371
  %v2426 = vmul.f32 %v1944, %v2376
  %v2427 = vmul.f32 %v1945, %v2376
  %v2428 = vmul.f32 %v1946, %v2381
  %v2429 = vmul.f32 %v1947, %v2381
  %v2430 = vmul.f32 %v1948, %v2386
  %v2431 = vmul.f32 %v1949, %v2386
  %v2432 = vmul.f32 %v1950, %v2391
  %v2433 = vmul.f32 %v1951, %v2391
  %v2434 = vmul.f32 %v1952, %v2396
  %v2435 = vmul.f32 %v1953, %v2396
  %v2436 = vmul.f32 %v1954, %v2401
  %v2437 = vmul.f32 %v1955, %v2401
  %v2438 = vmul.f32 %v1956, %v2406
  %v2439 = vmul.f32 %v1957, %v2406
  %2441 = vset.pattern.permute.xlu0 0
  %2442 = vperm.xlu0 %2441, %v2296
  %v2443 = vpop.permute.xlu0 %2442
  %2446 = vset.pattern.permute.xlu0 0
  %2447 = vperm.xlu0 %2446, %v2297
  %v2448 = vpop.permute.xlu0 %2447
  %2451 = vset.pattern.permute.xlu0 0
  %2452 = vperm.xlu0 %2451, %v2298
  %v2453 = vpop.permute.xlu0 %2452
  %2456 = vset.pattern.permute.xlu0 0
  %2457 = vperm.xlu0 %2456, %v2299
  %v2458 = vpop.permute.xlu0 %2457
  %2461 = vset.pattern.permute.xlu0 0
  %2462 = vperm.xlu0 %2461, %v2300
  %v2463 = vpop.permute.xlu0 %2462
  %2466 = vset.pattern.permute.xlu0 0
  %2467 = vperm.xlu0 %2466, %v2301
  %v2468 = vpop.permute.xlu0 %2467
  %2471 = vset.pattern.permute.xlu0 0
  %2472 = vperm.xlu0 %2471, %v2302
  %v2473 = vpop.permute.xlu0 %2472
  %2476 = vset.pattern.permute.xlu0 0
  %2477 = vperm.xlu0 %2476, %v2303
  %v2478 = vpop.permute.xlu0 %2477
  %2481 = vset.pattern.permute.xlu0 0
  %2482 = vperm.xlu0 %2481, %v2304
  %v2483 = vpop.permute.xlu0 %2482
  %2486 = vset.pattern.permute.xlu0 0
  %2487 = vperm.xlu0 %2486, %v2305
  %v2488 = vpop.permute.xlu0 %2487
  %2491 = vset.pattern.permute.xlu0 0
  %2492 = vperm.xlu0 %2491, %v2306
  %v2493 = vpop.permute.xlu0 %2492
  %2496 = vset.pattern.permute.xlu0 0
  %2497 = vperm.xlu0 %2496, %v2307
  %v2498 = vpop.permute.xlu0 %2497
  %2501 = vset.pattern.permute.xlu0 0
  %2502 = vperm.xlu0 %2501, %v2308
  %v2503 = vpop.permute.xlu0 %2502
  %2506 = vset.pattern.permute.xlu0 0
  %2507 = vperm.xlu0 %2506, %v2309
  %v2508 = vpop.permute.xlu0 %2507
  %2511 = vset.pattern.permute.xlu0 0
  %2512 = vperm.xlu0 %2511, %v2310
  %v2513 = vpop.permute.xlu0 %2512
  %2516 = vset.pattern.permute.xlu0 0
  %2517 = vperm.xlu0 %2516, %v2311
  %v2518 = vpop.permute.xlu0 %2517
  %v2520 = vadd.f32 %v2408, %v2443
  %v2521 = vadd.f32 %v2409, %v2443
  %v2522 = vadd.f32 %v2410, %v2448
  %v2523 = vadd.f32 %v2411, %v2448
  %v2524 = vadd.f32 %v2412, %v2453
  %v2525 = vadd.f32 %v2413, %v2453
  %v2526 = vadd.f32 %v2414, %v2458
  %v2527 = vadd.f32 %v2415, %v2458
  %v2528 = vadd.f32 %v2416, %v2463
  %v2529 = vadd.f32 %v2417, %v2463
  %v2530 = vadd.f32 %v2418, %v2468
  %v2531 = vadd.f32 %v2419, %v2468
  %v2532 = vadd.f32 %v2420, %v2473
  %v2533 = vadd.f32 %v2421, %v2473
  %v2534 = vadd.f32 %v2422, %v2478
  %v2535 = vadd.f32 %v2423, %v2478
  %v2536 = vadd.f32 %v2424, %v2483
  %v2537 = vadd.f32 %v2425, %v2483
  %v2538 = vadd.f32 %v2426, %v2488
  %v2539 = vadd.f32 %v2427, %v2488
  %v2540 = vadd.f32 %v2428, %v2493
  %v2541 = vadd.f32 %v2429, %v2493
  %v2542 = vadd.f32 %v2430, %v2498
  %v2543 = vadd.f32 %v2431, %v2498
  %v2544 = vadd.f32 %v2432, %v2503
  %v2545 = vadd.f32 %v2433, %v2503
  %v2546 = vadd.f32 %v2434, %v2508
  %v2547 = vadd.f32 %v2435, %v2508
  %v2548 = vadd.f32 %v2436, %v2513
  %v2549 = vadd.f32 %v2437, %v2513
  %v2550 = vadd.f32 %v2438, %v2518
  %v2551 = vadd.f32 %v2439, %v2518
  %v2552 = vmax.f32 %v2520, 0.0
  %v2553 = vmax.f32 %v2521, 0.0
  %v2554 = vmax.f32 %v2522, 0.0
  %v2555 = vmax.f32 %v2523, 0.0
  %v2556 = vmax.f32 %v2524, 0.0
  %v2557 = vmax.f32 %v2525, 0.0
  %v2558 = vmax.f32 %v2526, 0.0
  %v2559 = vmax.f32 %v2527, 0.0
  %v2560 = vmax.f32 %v2528, 0.0
  %v2561 = vmax.f32 %v2529, 0.0
  %v2562 = vmax.f32 %v2530, 0.0
  %v2563 = vmax.f32 %v2531, 0.0
  %v2564 = vmax.f32 %v2532, 0.0
  %v2565 = vmax.f32 %v2533, 0.0
  %v2566 = vmax.f32 %v2534, 0.0
  %v2567 = vmax.f32 %v2535, 0.0
  %v2568 = vmax.f32 %v2536, 0.0
  %v2569 = vmax.f32 %v2537, 0.0
  %v2570 = vmax.f32 %v2538, 0.0
  %v2571 = vmax.f32 %v2539, 0.0
  %v2572 = vmax.f32 %v2540, 0.0
  %v2573 = vmax.f32 %v2541, 0.0
  %v2574 = vmax.f32 %v2542, 0.0
  %v2575 = vmax.f32 %v2543, 0.0
  %v2576 = vmax.f32 %v2544, 0.0
  %v2577 = vmax.f32 %v2545, 0.0
  %v2578 = vmax.f32 %v2546, 0.0
  %v2579 = vmax.f32 %v2547, 0.0
  %v2580 = vmax.f32 %v2548, 0.0
  %v2581 = vmax.f32 %v2549, 0.0
  %v2582 = vmax.f32 %v2550, 0.0
  %v2583 = vmax.f32 %v2551, 0.0
  %2584 = vst [vmem:[%s4] sm:$0xff] %v2552
  %2585 = vst.msk [vmem:[%s4 + $0x8] sm:$0xff] %vm1838, %v2553
  %2586 = vst [vmem:[%s4 + $0x10] sm:$0xff] %v2554
  %2587 = vst.msk [vmem:[%s4 + $0x18] sm:$0xff] %vm1838, %v2555
  %2588 = vst [vmem:[%s4 + $0x20] sm:$0xff] %v2556
  %2589 = vst.msk [vmem:[%s4 + $0x28] sm:$0xff] %vm1838, %v2557
  %2590 = vst [vmem:[%s4 + $0x30] sm:$0xff] %v2558
  %2591 = vst.msk [vmem:[%s4 + $0x38] sm:$0xff] %vm1838, %v2559
  %2592 = vst [vmem:[%s4 + $0x40] sm:$0xff] %v2560
  %2593 = vst.msk [vmem:[%s4 + $0x48] sm:$0xff] %vm1838, %v2561
  %2594 = vst [vmem:[%s4 + $0x50] sm:$0xff] %v2562
  %2595 = vst.msk [vmem:[%s4 + $0x58] sm:$0xff] %vm1838, %v2563
  %2596 = vst [vmem:[%s4 + $0x60] sm:$0xff] %v2564
  %2597 = vst.msk [vmem:[%s4 + $0x68] sm:$0xff] %vm1838, %v2565
  %2598 = vst [vmem:[%s4 + $0x70] sm:$0xff] %v2566
  %2599 = vst.msk [vmem:[%s4 + $0x78] sm:$0xff] %vm1838, %v2567
  %2600 = vst [vmem:[%s4 + $0x80] sm:$0xff] %v2568
  %2601 = vst.msk [vmem:[%s4 + $0x88] sm:$0xff] %vm1838, %v2569
  %2602 = vst [vmem:[%s4 + $0x90] sm:$0xff] %v2570
  %2603 = vst.msk [vmem:[%s4 + $0x98] sm:$0xff] %vm1838, %v2571
  %2604 = vst [vmem:[%s4 + $0xa0] sm:$0xff] %v2572
  %2605 = vst.msk [vmem:[%s4 + $0xa8] sm:$0xff] %vm1838, %v2573
  %2606 = vst [vmem:[%s4 + $0xb0] sm:$0xff] %v2574
  %2607 = vst.msk [vmem:[%s4 + $0xb8] sm:$0xff] %vm1838, %v2575
  %2608 = vst [vmem:[%s4 + $0xc0] sm:$0xff] %v2576
  %2609 = vst.msk [vmem:[%s4 + $0xc8] sm:$0xff] %vm1838, %v2577
  %2610 = vst [vmem:[%s4 + $0xd0] sm:$0xff] %v2578
  %2611 = vst.msk [vmem:[%s4 + $0xd8] sm:$0xff] %vm1838, %v2579
  %2612 = vst [vmem:[%s4 + $0xe0] sm:$0xff] %v2580
  %2613 = vst.msk [vmem:[%s4 + $0xe8] sm:$0xff] %vm1838, %v2581
  %2614 = vst [vmem:[%s4 + $0xf0] sm:$0xff] %v2582
  %2615 = vst.msk [vmem:[%s4 + $0xf8] sm:$0xff] %vm1838, %v2583
  // Predicated region
  $region18: #{conv_bn_relu.1} parent=0 // pred_check
    _
  $region19: #{conv_bn_relu.1} parent=0 // pred_check_branch
    %2617 = sbr.rel (0) target = $region21
  $region20: #{conv_bn_relu.1} parent=0 // pred_region
    _
  $region21: #{conv_bn_relu.1} parent=0 // pred_fallthru
    _
  // Predicated region
  $region22: #{conv_bn_relu.1} parent=0 // pred_check
    _
  $region23: #{conv_bn_relu.1} parent=0 // pred_check_branch
    %2619 = sbr.rel (0) target = $region25
  $region24: #{conv_bn_relu.1} parent=0 // pred_region
    _
  $region25: #{conv_bn_relu.1} parent=0 // pred_fallthru
    _

</llo_original>
